<compile_context>
chip_gen: v7x
topology: tpu7x:2x2x1
jax: 0.10.0
libtpu: 0.0.40
codegen_flags: <defaults>
</compile_context>

<pallas_src>
import functools

import numpy as np
import jax
import jax.numpy as jnp
from jax.experimental import pallas as pl
from jax.experimental.pallas import tpu as pltpu

_MXU_DTYPE = jnp.bfloat16          # MXU operand dtype; accumulation stays float32


def _round_up(v, m):
    return (v + m - 1) // m * m


def _pick_b_tile(n, hw, target_lanes=2048):
    """How many images to fold into the GEMM lane (RHS-N) dimension per grid step."""
    if hw % 128 != 0:
        return 1                   # folded per-image lane slices must stay 128-aligned
    divs = [d for d in range(1, n + 1)
            if n % d == 0 and (d == 1 or d * hw <= target_lanes)]
    two_plus = [d for d in divs if n // d >= 2]   # keep >=2 grid steps for v7x's 2 TCs
    return max(two_plus) if two_plus else max(divs)


def _tap_masks(H, W):
    """(16, H*W) f32 {0,1}: row t=kh*3+kw is 1 where output pixel (h,w) has a valid
    3x3/pad-1 source for that tap.  Rows 9..15 are padding (sublane alignment)."""
    hh, ww = np.meshgrid(np.arange(H), np.arange(W), indexing="ij")
    rows = []
    for kh in range(3):
        for kw in range(3):
            dh, dw = kh - 1, kw - 1
            valid = (hh + dh >= 0) & (hh + dh < H) & (ww + dw >= 0) & (ww + dw < W)
            rows.append(valid.reshape(-1))
    m = np.stack(rows, 0).astype(np.float32)
    return np.concatenate([m, np.zeros((16 - 9, H * W), np.float32)], 0)


def _conv1_weight_matrix(w_oihw, cin_p, cmid_p):
    """(Cmid, Cin, 3, 3) OIHW -> (cmid_p, 9*cin_p) bf16 im2col matrix, columns ordered
    (kh, kw, ci), zero-extended over the channel padding."""
    cmid, cin = w_oihw.shape[0], w_oihw.shape[1]
    w = jnp.zeros((cmid_p, cin_p, 3, 3), w_oihw.dtype).at[:cmid, :cin].set(w_oihw)
    return jnp.transpose(w, (0, 2, 3, 1)).reshape(cmid_p, 9 * cin_p).astype(_MXU_DTYPE)


def _convt_weight_matrix(wt, cmid_p):
    """Polyphase rearrangement of a torch ConvTranspose2d(4, s=2, p=1) weight.

    wt: (Cmid, Cout, 4, 4).  Output row (co*4 + rh*2 + rw) produces output pixels
    (2h+rh, 2w+rw); its columns are laid out like a 3x3/pad-1 im2col over the
    intermediate (zero-extended over the channel padding)."""
    cmid, cout = wt.shape[0], wt.shape[1]
    w = jnp.zeros((cout, 2, 2, 3, 3, cmid_p), wt.dtype)
    for rh in range(2):
        for rw in range(2):
            for eh in range(rh, rh + 2):      # only 2 of the 3 taps are live per phase
                for ew in range(rw, rw + 2):
                    kh = 3 + rh - 2 * eh
                    kw = 3 + rw - 2 * ew
                    w = w.at[:, rh, rw, eh, ew, :cmid].set(wt[:, :, kh, kw].T)
    return w.reshape(4 * cout, 9 * cmid_p).astype(_MXU_DTYPE)


def _decoder_block_kernel(x_ref, m_ref, w1_ref, b1_ref, w2_ref, b2_ref, o_ref,
                          col1_ref, col2_ref, *, H, W, cin_p, cmid_p, b_tile):
    """Fused DecoderBlock forward for b_tile batch elements.

    x_ref  : (b_tile, cin_p, H*W)   f32, channels zero-padded to a multiple of 8
    m_ref  : (16, H*W)              f32 {0,1} boundary masks (tap t = row t, 9 live rows)
    w1_ref : (cmid_p, 9*cin_p)      bf16 conv1 weight as an im2col matrix
    b1_ref : (cmid_p, 1)            f32
    w2_ref : (4*cout, 9*cmid_p)     bf16 polyphase conv-transpose weight (3x3 im2col form)
    b2_ref : (4*cout, 1)            f32
    o_ref  : (b_tile, 4*cout, H*W)  f32, row co*4 + rh*2 + rw -> output pixel (2h+rh, 2w+rw)
    col1/col2 : bf16 im2col scratches of shape (9*cin_p | 9*cmid_p, b_tile*H*W)
    """
    HW = H * W
    rows_bcast = max(cin_p, cmid_p)

    # Hoist one sublane-broadcast per tap; reused by both convs and all folded images
    # (JAX does not CSE broadcast_in_dim inside the unrolled loops below).
    shifts = [(kh - 1) * W + (kw - 1) for kh in range(3) for kw in range(3)]
    msk = [jnp.broadcast_to(m_ref[t, :], (rows_bcast, HW)) for t in range(9)]

    def build_im2col(col_ref, rows, read_img):
        # col[t*rows + ci, b*HW + hw] = src_b[ci, hw + shift] masked to the image interior.
        # One full-width, lane-dense store per (tap, image); the roll rides the XLU slot
        # and the destination-indexed mask zeroes every wrapped / out-of-bounds lane, so
        # no zero-fill of the scratch is required.
        for t, s in enumerate(shifts):
            m = msk[t][:rows]
            sh = (-s) % HW
            for b in range(b_tile):
                src = read_img(b)                                     # (rows, HW) f32
                shifted = src if sh == 0 else pltpu.roll(src, sh, 1)
                col_ref[t * rows:(t + 1) * rows, b * HW:(b + 1) * HW] = (
                    (shifted * m).astype(col_ref.dtype))              # f32 mul, bf16 store

    # ---- ConvRelu: Conv2d(3x3, s=1, p=1) + bias + ReLU as ONE GEMM over b_tile*HW lanes
    build_im2col(col1_ref, cin_p, lambda b: x_ref[b])
    y = jnp.dot(w1_ref[...], col1_ref[...], preferred_element_type=jnp.float32)
    y = jnp.maximum(y + b1_ref[...], 0.0)          # (cmid_p, b_tile*HW), never leaves chip

    # ---- ConvTranspose2d(4x4, s=2, p=1) + bias + ReLU, polyphase form: all four output
    #      parities come out of ONE 3x3/pad-1 im2col GEMM over the intermediate.
    build_im2col(col2_ref, cmid_p, lambda b: y[:, b * HW:(b + 1) * HW])
    z = jnp.dot(w2_ref[...], col2_ref[...], preferred_element_type=jnp.float32)
    z = jnp.maximum(z + b2_ref[...], 0.0)
    for b in range(b_tile):                        # lane-dense (4*cout, HW) stores
        o_ref[b] = z[:, b * HW:(b + 1) * HW]


@jax.jit
def decoder_block_forward(x_nchw, params):
    """DecoderBlock.forward: ConvRelu(3x3, p=1) -> ConvTranspose2d(4x4, s=2, p=1) -> ReLU."""
    n, cin, H, W = x_nchw.shape
    HW = H * W
    w1, b1 = params["conv1_w"], params["conv1_b"]
    wt, b2 = params["convt_w"], params["convt_b"]
    cmid, cout = w1.shape[0], wt.shape[1]
    cin_p, cmid_p = _round_up(cin, 8), _round_up(cmid, 8)
    b_tile = _pick_b_tile(n, HW)                   # fold images into the GEMM lane dim
    grid = (n // b_tile,)

    # Tiny one-time weight / bias / mask / padding prep (outside the Pallas kernel).
    w1m = _conv1_weight_matrix(w1, cin_p, cmid_p)                  # (cmid_p, 9*cin_p) bf16
    b1m = jnp.zeros((cmid_p, 1), jnp.float32).at[:cmid, 0].set(b1)
    w2m = _convt_weight_matrix(wt, cmid_p)                         # (4*cout, 9*cmid_p) bf16
    b2m = jnp.repeat(b2, 4).reshape(4 * cout, 1).astype(jnp.float32)
    masks = _tap_masks(H, W)                                       # (16, HW) baked constant

    x_flat = x_nchw.reshape(n, cin, HW)     # free: NCHW already has H*W contiguous
    if cin_p != cin:                        # pad channels so every col1 tap strip is a
        x_flat = jnp.pad(x_flat, ((0, 0), (0, cin_p - cin), (0, 0)))  # full aligned tile

    # NOTE(v7x VMEM): scratch here is ~2 * 9*C*b_tile*HW*2B; at realistic decoder sizes
    # re-budget for 64 MiB VMEM (add a spatial-tile grid axis / raise vmem_limit_bytes).
    kernel = functools.partial(_decoder_block_kernel, H=H, W=W,
                               cin_p=cin_p, cmid_p=cmid_p, b_tile=b_tile)
    out = pl.pallas_call(
        kernel,
        out_shape=jax.ShapeDtypeStruct((n, 4 * cout, HW), jnp.float32),
        grid=grid,
        in_specs=[
            pl.BlockSpec((b_tile, cin_p, HW), lambda i: (i, 0, 0)),
            pl.BlockSpec((16, HW), lambda i: (0, 0)),
            pl.BlockSpec((cmid_p, 9 * cin_p), lambda i: (0, 0)),
            pl.BlockSpec((cmid_p, 1), lambda i: (0, 0)),
            pl.BlockSpec((4 * cout, 9 * cmid_p), lambda i: (0, 0)),
            pl.BlockSpec((4 * cout, 1), lambda i: (0, 0)),
        ],
        out_specs=pl.BlockSpec((b_tile, 4 * cout, HW), lambda i: (i, 0, 0)),
        scratch_shapes=[
            pltpu.VMEM((9 * cin_p, b_tile * HW), _MXU_DTYPE),    # im2col of x
            pltpu.VMEM((9 * cmid_p, b_tile * HW), _MXU_DTYPE),   # im2col of intermediate
        ],
        compiler_params=pltpu.CompilerParams(dimension_semantics=("parallel",)),
    )(x_flat, masks, w1m, b1m, w2m, b2m)

    # Phase de-interleave (tiny): (N, Cout*{rh,rw}, H*W) -> (N, Cout, 2H, 2W) NCHW.
    # Kept in XLA because the module boundary requires NCHW; inside a network this
    # de-interleave folds into the consumer's weight permutation / index_map instead.
    z = out.reshape(n, cout, 2, 2, H, W)
    return jnp.transpose(z, (0, 1, 4, 2, 5, 3)).reshape(n, cout, 2 * H, 2 * W)


def reference_forward(x_nchw, params):
    """Pure-JAX reference (lax convolutions, f32) matching PyTorch semantics."""
    dn = ("NHWC", "HWIO", "NHWC")
    x = jnp.transpose(x_nchw, (0, 2, 3, 1))
    w1 = jnp.transpose(params["conv1_w"], (2, 3, 1, 0))
    y = jax.lax.conv_general_dilated(x, w1, (1, 1), [(1, 1), (1, 1)], dimension_numbers=dn)
    y = jnp.maximum(y + params["conv1_b"], 0.0)
    w2 = jnp.transpose(params["convt_w"], (2, 3, 0, 1))[::-1, ::-1, :, :]
    z = jax.lax.conv_general_dilated(y, w2, (1, 1), [(2, 2), (2, 2)],
                                     lhs_dilation=(2, 2), dimension_numbers=dn)
    z = jnp.maximum(z + params["convt_b"], 0.0)
    return jnp.transpose(z, (0, 3, 1, 2))


if __name__ == "__main__":
    in_depth, mid_depth, out_depth = 4, 8, 4
    N, H, W = 4, 16, 16          # N=4 -> b_tile=2 (batch folding) and 2 parallel grid steps

    key = jax.random.PRNGKey(0)
    k1, k2, k3, k4, k5 = jax.random.split(key, 5)
    params = {
        # Conv2d(in_depth, mid_depth, 3) weights (OIHW) + bias
        "conv1_w": 0.1 * jax.random.normal(k1, (mid_depth, in_depth, 3, 3), jnp.float32),
        "conv1_b": 0.1 * jax.random.normal(k2, (mid_depth,), jnp.float32),
        # ConvTranspose2d(mid_depth, out_depth, 4) weights (Cin, Cout, kH, kW) + bias
        "convt_w": 0.1 * jax.random.normal(k3, (mid_depth, out_depth, 4, 4), jnp.float32),
        "convt_b": 0.1 * jax.random.normal(k4, (out_depth,), jnp.float32),
    }
    x = jax.random.normal(k5, (N, in_depth, H, W), jnp.float32)

    out = jax.block_until_ready(decoder_block_forward(x, params))
    ref = jax.block_until_ready(reference_forward(x, params))

    assert out.shape == (N, out_depth, 2 * H, 2 * W), out.shape
    # Tolerance reflects bf16 MXU operands with f32 accumulation (per perf review).
    np.testing.assert_allclose(np.asarray(out), np.asarray(ref), atol=2e-2, rtol=2e-2)
    print("KERNEL_OK")
</pallas_src>

<mosaic_0001>
module attributes {stable_mosaic.version = 11 : i64} {
  func.func @_decoder_block_kernel(%arg0: i32, %arg1: memref<2x8x256xf32, #tpu.memory_space<vmem>>, %arg2: memref<16x256xf32, #tpu.memory_space<vmem>>, %arg3: memref<8x72xbf16, #tpu.memory_space<vmem>>, %arg4: memref<8x1xf32, #tpu.memory_space<vmem>>, %arg5: memref<16x72xbf16, #tpu.memory_space<vmem>>, %arg6: memref<16x1xf32, #tpu.memory_space<vmem>>, %arg7: memref<2x16x256xf32, #tpu.memory_space<vmem>>, %arg8: memref<72x512xbf16, #tpu.memory_space<vmem>>, %arg9: memref<72x512xbf16, #tpu.memory_space<vmem>>) attributes {dimension_semantics = [#tpu.dimension_semantics<parallel>], iteration_bounds = array<i64: 2>, scalar_prefetch = 0 : i64, scratch_operands = 2 : i64, tpu.core_type = #tpu.core_type<tc>, window_params = [{transform_indices = @transform_0, window_bounds = array<i64: 2, 8, 256>}, {pipeline_mode = #tpu.pipeline_mode<synchronous>, transform_indices = @transform_1, window_bounds = array<i64: 16, 256>}, {pipeline_mode = #tpu.pipeline_mode<synchronous>, transform_indices = @transform_2, window_bounds = array<i64: 8, 72>}, {pipeline_mode = #tpu.pipeline_mode<synchronous>, transform_indices = @transform_3, window_bounds = array<i64: 8, 1>}, {pipeline_mode = #tpu.pipeline_mode<synchronous>, transform_indices = @transform_4, window_bounds = array<i64: 16, 72>}, {pipeline_mode = #tpu.pipeline_mode<synchronous>, transform_indices = @transform_5, window_bounds = array<i64: 16, 1>}, {transform_indices = @transform_6, window_bounds = array<i64: 2, 16, 256>}]} {
    %c0 = arith.constant 0 : index
    %c0_0 = arith.constant 0 : index
    %0 = vector.load %arg2[%c0, %c0_0] : memref<16x256xf32, #tpu.memory_space<vmem>>, vector<1x256xf32>
    %1 = vector.shape_cast %0 : vector<1x256xf32> to vector<256xf32>
    %2 = vector.shape_cast %1 : vector<256xf32> to vector<1x256xf32>
    %3 = vector.broadcast %2 : vector<1x256xf32> to vector<8x256xf32>
    %c1 = arith.constant 1 : index
    %c0_1 = arith.constant 0 : index
    %4 = vector.load %arg2[%c1, %c0_1] : memref<16x256xf32, #tpu.memory_space<vmem>>, vector<1x256xf32>
    %5 = vector.shape_cast %4 : vector<1x256xf32> to vector<256xf32>
    %6 = vector.shape_cast %5 : vector<256xf32> to vector<1x256xf32>
    %7 = vector.broadcast %6 : vector<1x256xf32> to vector<8x256xf32>
    %c2 = arith.constant 2 : index
    %c0_2 = arith.constant 0 : index
    %8 = vector.load %arg2[%c2, %c0_2] : memref<16x256xf32, #tpu.memory_space<vmem>>, vector<1x256xf32>
    %9 = vector.shape_cast %8 : vector<1x256xf32> to vector<256xf32>
    %10 = vector.shape_cast %9 : vector<256xf32> to vector<1x256xf32>
    %11 = vector.broadcast %10 : vector<1x256xf32> to vector<8x256xf32>
    %c3 = arith.constant 3 : index
    %c0_3 = arith.constant 0 : index
    %12 = vector.load %arg2[%c3, %c0_3] : memref<16x256xf32, #tpu.memory_space<vmem>>, vector<1x256xf32>
    %13 = vector.shape_cast %12 : vector<1x256xf32> to vector<256xf32>
    %14 = vector.shape_cast %13 : vector<256xf32> to vector<1x256xf32>
    %15 = vector.broadcast %14 : vector<1x256xf32> to vector<8x256xf32>
    %c4 = arith.constant 4 : index
    %c0_4 = arith.constant 0 : index
    %16 = vector.load %arg2[%c4, %c0_4] : memref<16x256xf32, #tpu.memory_space<vmem>>, vector<1x256xf32>
    %17 = vector.shape_cast %16 : vector<1x256xf32> to vector<256xf32>
    %18 = vector.shape_cast %17 : vector<256xf32> to vector<1x256xf32>
    %19 = vector.broadcast %18 : vector<1x256xf32> to vector<8x256xf32>
    %c5 = arith.constant 5 : index
    %c0_5 = arith.constant 0 : index
    %20 = vector.load %arg2[%c5, %c0_5] : memref<16x256xf32, #tpu.memory_space<vmem>>, vector<1x256xf32>
    %21 = vector.shape_cast %20 : vector<1x256xf32> to vector<256xf32>
    %22 = vector.shape_cast %21 : vector<256xf32> to vector<1x256xf32>
    %23 = vector.broadcast %22 : vector<1x256xf32> to vector<8x256xf32>
    %c6 = arith.constant 6 : index
    %c0_6 = arith.constant 0 : index
    %24 = vector.load %arg2[%c6, %c0_6] : memref<16x256xf32, #tpu.memory_space<vmem>>, vector<1x256xf32>
    %25 = vector.shape_cast %24 : vector<1x256xf32> to vector<256xf32>
    %26 = vector.shape_cast %25 : vector<256xf32> to vector<1x256xf32>
    %27 = vector.broadcast %26 : vector<1x256xf32> to vector<8x256xf32>
    %c7 = arith.constant 7 : index
    %c0_7 = arith.constant 0 : index
    %28 = vector.load %arg2[%c7, %c0_7] : memref<16x256xf32, #tpu.memory_space<vmem>>, vector<1x256xf32>
    %29 = vector.shape_cast %28 : vector<1x256xf32> to vector<256xf32>
    %30 = vector.shape_cast %29 : vector<256xf32> to vector<1x256xf32>
    %31 = vector.broadcast %30 : vector<1x256xf32> to vector<8x256xf32>
    %c8 = arith.constant 8 : index
    %c0_8 = arith.constant 0 : index
    %32 = vector.load %arg2[%c8, %c0_8] : memref<16x256xf32, #tpu.memory_space<vmem>>, vector<1x256xf32>
    %33 = vector.shape_cast %32 : vector<1x256xf32> to vector<256xf32>
    %34 = vector.shape_cast %33 : vector<256xf32> to vector<1x256xf32>
    %35 = vector.broadcast %34 : vector<1x256xf32> to vector<8x256xf32>
    %c0_9 = arith.constant 0 : index
    %c0_10 = arith.constant 0 : index
    %c0_11 = arith.constant 0 : index
    %36 = vector.load %arg1[%c0_9, %c0_10, %c0_11] : memref<2x8x256xf32, #tpu.memory_space<vmem>>, vector<1x8x256xf32>
    %37 = vector.shape_cast %36 : vector<1x8x256xf32> to vector<8x256xf32>
    %c17_i32 = arith.constant 17 : i32
    %38 = tpu.dynamic_rotate %37 by %c17_i32 dim 1 : vector<8x256xf32>, i32 -> vector<8x256xf32>
    %39 = arith.mulf %38, %3 : vector<8x256xf32>
    %40 = arith.truncf %39 : vector<8x256xf32> to vector<8x256xbf16>
    %c0_12 = arith.constant 0 : index
    %c0_13 = arith.constant 0 : index
    %41 = vector.load %arg8[%c0_12, %c0_13] : memref<72x512xbf16, #tpu.memory_space<vmem>>, vector<8x256xbf16>
    tpu.vector_store %arg8[%c0_12, %c0_13], %40 {strides = array<i32>} : memref<72x512xbf16, #tpu.memory_space<vmem>>, vector<8x256xbf16>,
    %c1_14 = arith.constant 1 : index
    %c0_15 = arith.constant 0 : index
    %c0_16 = arith.constant 0 : index
    %42 = vector.load %arg1[%c1_14, %c0_15, %c0_16] : memref<2x8x256xf32, #tpu.memory_space<vmem>>, vector<1x8x256xf32>
    %43 = vector.shape_cast %42 : vector<1x8x256xf32> to vector<8x256xf32>
    %c17_i32_17 = arith.constant 17 : i32
    %44 = tpu.dynamic_rotate %43 by %c17_i32_17 dim 1 : vector<8x256xf32>, i32 -> vector<8x256xf32>
    %45 = arith.mulf %44, %3 : vector<8x256xf32>
    %46 = arith.truncf %45 : vector<8x256xf32> to vector<8x256xbf16>
    %c0_18 = arith.constant 0 : index
    %c256 = arith.constant 256 : index
    %47 = vector.load %arg8[%c0_18, %c256] : memref<72x512xbf16, #tpu.memory_space<vmem>>, vector<8x256xbf16>
    tpu.vector_store %arg8[%c0_18, %c256], %46 {strides = array<i32>} : memref<72x512xbf16, #tpu.memory_space<vmem>>, vector<8x256xbf16>,
    %c0_19 = arith.constant 0 : index
    %c0_20 = arith.constant 0 : index
    %c0_21 = arith.constant 0 : index
    %48 = vector.load %arg1[%c0_19, %c0_20, %c0_21] : memref<2x8x256xf32, #tpu.memory_space<vmem>>, vector<1x8x256xf32>
    %49 = vector.shape_cast %48 : vector<1x8x256xf32> to vector<8x256xf32>
    %c16_i32 = arith.constant 16 : i32
    %50 = tpu.dynamic_rotate %49 by %c16_i32 dim 1 : vector<8x256xf32>, i32 -> vector<8x256xf32>
    %51 = arith.mulf %50, %7 : vector<8x256xf32>
    %52 = arith.truncf %51 : vector<8x256xf32> to vector<8x256xbf16>
    %c8_22 = arith.constant 8 : index
    %c0_23 = arith.constant 0 : index
    %53 = vector.load %arg8[%c8_22, %c0_23] : memref<72x512xbf16, #tpu.memory_space<vmem>>, vector<8x256xbf16>
    tpu.vector_store %arg8[%c8_22, %c0_23], %52 {strides = array<i32>} : memref<72x512xbf16, #tpu.memory_space<vmem>>, vector<8x256xbf16>,
    %c1_24 = arith.constant 1 : index
    %c0_25 = arith.constant 0 : index
    %c0_26 = arith.constant 0 : index
    %54 = vector.load %arg1[%c1_24, %c0_25, %c0_26] : memref<2x8x256xf32, #tpu.memory_space<vmem>>, vector<1x8x256xf32>
    %55 = vector.shape_cast %54 : vector<1x8x256xf32> to vector<8x256xf32>
    %c16_i32_27 = arith.constant 16 : i32
    %56 = tpu.dynamic_rotate %55 by %c16_i32_27 dim 1 : vector<8x256xf32>, i32 -> vector<8x256xf32>
    %57 = arith.mulf %56, %7 : vector<8x256xf32>
    %58 = arith.truncf %57 : vector<8x256xf32> to vector<8x256xbf16>
    %c8_28 = arith.constant 8 : index
    %c256_29 = arith.constant 256 : index
    %59 = vector.load %arg8[%c8_28, %c256_29] : memref<72x512xbf16, #tpu.memory_space<vmem>>, vector<8x256xbf16>
    tpu.vector_store %arg8[%c8_28, %c256_29], %58 {strides = array<i32>} : memref<72x512xbf16, #tpu.memory_space<vmem>>, vector<8x256xbf16>,
    %c0_30 = arith.constant 0 : index
    %c0_31 = arith.constant 0 : index
    %c0_32 = arith.constant 0 : index
    %60 = vector.load %arg1[%c0_30, %c0_31, %c0_32] : memref<2x8x256xf32, #tpu.memory_space<vmem>>, vector<1x8x256xf32>
    %61 = vector.shape_cast %60 : vector<1x8x256xf32> to vector<8x256xf32>
    %c15_i32 = arith.constant 15 : i32
    %62 = tpu.dynamic_rotate %61 by %c15_i32 dim 1 : vector<8x256xf32>, i32 -> vector<8x256xf32>
    %63 = arith.mulf %62, %11 : vector<8x256xf32>
    %64 = arith.truncf %63 : vector<8x256xf32> to vector<8x256xbf16>
    %c16 = arith.constant 16 : index
    %c0_33 = arith.constant 0 : index
    %65 = vector.load %arg8[%c16, %c0_33] : memref<72x512xbf16, #tpu.memory_space<vmem>>, vector<8x256xbf16>
    tpu.vector_store %arg8[%c16, %c0_33], %64 {strides = array<i32>} : memref<72x512xbf16, #tpu.memory_space<vmem>>, vector<8x256xbf16>,
    %c1_34 = arith.constant 1 : index
    %c0_35 = arith.constant 0 : index
    %c0_36 = arith.constant 0 : index
    %66 = vector.load %arg1[%c1_34, %c0_35, %c0_36] : memref<2x8x256xf32, #tpu.memory_space<vmem>>, vector<1x8x256xf32>
    %67 = vector.shape_cast %66 : vector<1x8x256xf32> to vector<8x256xf32>
    %c15_i32_37 = arith.constant 15 : i32
    %68 = tpu.dynamic_rotate %67 by %c15_i32_37 dim 1 : vector<8x256xf32>, i32 -> vector<8x256xf32>
    %69 = arith.mulf %68, %11 : vector<8x256xf32>
    %70 = arith.truncf %69 : vector<8x256xf32> to vector<8x256xbf16>
    %c16_38 = arith.constant 16 : index
    %c256_39 = arith.constant 256 : index
    %71 = vector.load %arg8[%c16_38, %c256_39] : memref<72x512xbf16, #tpu.memory_space<vmem>>, vector<8x256xbf16>
    tpu.vector_store %arg8[%c16_38, %c256_39], %70 {strides = array<i32>} : memref<72x512xbf16, #tpu.memory_space<vmem>>, vector<8x256xbf16>,
    %c0_40 = arith.constant 0 : index
    %c0_41 = arith.constant 0 : index
    %c0_42 = arith.constant 0 : index
    %72 = vector.load %arg1[%c0_40, %c0_41, %c0_42] : memref<2x8x256xf32, #tpu.memory_space<vmem>>, vector<1x8x256xf32>
    %73 = vector.shape_cast %72 : vector<1x8x256xf32> to vector<8x256xf32>
    %c1_i32 = arith.constant 1 : i32
    %74 = tpu.dynamic_rotate %73 by %c1_i32 dim 1 : vector<8x256xf32>, i32 -> vector<8x256xf32>
    %75 = arith.mulf %74, %15 : vector<8x256xf32>
    %76 = arith.truncf %75 : vector<8x256xf32> to vector<8x256xbf16>
    %c24 = arith.constant 24 : index
    %c0_43 = arith.constant 0 : index
    %77 = vector.load %arg8[%c24, %c0_43] : memref<72x512xbf16, #tpu.memory_space<vmem>>, vector<8x256xbf16>
    tpu.vector_store %arg8[%c24, %c0_43], %76 {strides = array<i32>} : memref<72x512xbf16, #tpu.memory_space<vmem>>, vector<8x256xbf16>,
    %c1_44 = arith.constant 1 : index
    %c0_45 = arith.constant 0 : index
    %c0_46 = arith.constant 0 : index
    %78 = vector.load %arg1[%c1_44, %c0_45, %c0_46] : memref<2x8x256xf32, #tpu.memory_space<vmem>>, vector<1x8x256xf32>
    %79 = vector.shape_cast %78 : vector<1x8x256xf32> to vector<8x256xf32>
    %c1_i32_47 = arith.constant 1 : i32
    %80 = tpu.dynamic_rotate %79 by %c1_i32_47 dim 1 : vector<8x256xf32>, i32 -> vector<8x256xf32>
    %81 = arith.mulf %80, %15 : vector<8x256xf32>
    %82 = arith.truncf %81 : vector<8x256xf32> to vector<8x256xbf16>
    %c24_48 = arith.constant 24 : index
    %c256_49 = arith.constant 256 : index
    %83 = vector.load %arg8[%c24_48, %c256_49] : memref<72x512xbf16, #tpu.memory_space<vmem>>, vector<8x256xbf16>
    tpu.vector_store %arg8[%c24_48, %c256_49], %82 {strides = array<i32>} : memref<72x512xbf16, #tpu.memory_space<vmem>>, vector<8x256xbf16>,
    %c0_50 = arith.constant 0 : index
    %c0_51 = arith.constant 0 : index
    %c0_52 = arith.constant 0 : index
    %84 = vector.load %arg1[%c0_50, %c0_51, %c0_52] : memref<2x8x256xf32, #tpu.memory_space<vmem>>, vector<1x8x256xf32>
    %85 = vector.shape_cast %84 : vector<1x8x256xf32> to vector<8x256xf32>
    %86 = arith.mulf %85, %19 : vector<8x256xf32>
    %87 = arith.truncf %86 : vector<8x256xf32> to vector<8x256xbf16>
    %c32 = arith.constant 32 : index
    %c0_53 = arith.constant 0 : index
    %88 = vector.load %arg8[%c32, %c0_53] : memref<72x512xbf16, #tpu.memory_space<vmem>>, vector<8x256xbf16>
    tpu.vector_store %arg8[%c32, %c0_53], %87 {strides = array<i32>} : memref<72x512xbf16, #tpu.memory_space<vmem>>, vector<8x256xbf16>,
    %c1_54 = arith.constant 1 : index
    %c0_55 = arith.constant 0 : index
    %c0_56 = arith.constant 0 : index
    %89 = vector.load %arg1[%c1_54, %c0_55, %c0_56] : memref<2x8x256xf32, #tpu.memory_space<vmem>>, vector<1x8x256xf32>
    %90 = vector.shape_cast %89 : vector<1x8x256xf32> to vector<8x256xf32>
    %91 = arith.mulf %90, %19 : vector<8x256xf32>
    %92 = arith.truncf %91 : vector<8x256xf32> to vector<8x256xbf16>
    %c32_57 = arith.constant 32 : index
    %c256_58 = arith.constant 256 : index
    %93 = vector.load %arg8[%c32_57, %c256_58] : memref<72x512xbf16, #tpu.memory_space<vmem>>, vector<8x256xbf16>
    tpu.vector_store %arg8[%c32_57, %c256_58], %92 {strides = array<i32>} : memref<72x512xbf16, #tpu.memory_space<vmem>>, vector<8x256xbf16>,
    %c0_59 = arith.constant 0 : index
    %c0_60 = arith.constant 0 : index
    %c0_61 = arith.constant 0 : index
    %94 = vector.load %arg1[%c0_59, %c0_60, %c0_61] : memref<2x8x256xf32, #tpu.memory_space<vmem>>, vector<1x8x256xf32>
    %95 = vector.shape_cast %94 : vector<1x8x256xf32> to vector<8x256xf32>
    %c255_i32 = arith.constant 255 : i32
    %96 = tpu.dynamic_rotate %95 by %c255_i32 dim 1 : vector<8x256xf32>, i32 -> vector<8x256xf32>
    %97 = arith.mulf %96, %23 : vector<8x256xf32>
    %98 = arith.truncf %97 : vector<8x256xf32> to vector<8x256xbf16>
    %c40 = arith.constant 40 : index
    %c0_62 = arith.constant 0 : index
    %99 = vector.load %arg8[%c40, %c0_62] : memref<72x512xbf16, #tpu.memory_space<vmem>>, vector<8x256xbf16>
    tpu.vector_store %arg8[%c40, %c0_62], %98 {strides = array<i32>} : memref<72x512xbf16, #tpu.memory_space<vmem>>, vector<8x256xbf16>,
    %c1_63 = arith.constant 1 : index
    %c0_64 = arith.constant 0 : index
    %c0_65 = arith.constant 0 : index
    %100 = vector.load %arg1[%c1_63, %c0_64, %c0_65] : memref<2x8x256xf32, #tpu.memory_space<vmem>>, vector<1x8x256xf32>
    %101 = vector.shape_cast %100 : vector<1x8x256xf32> to vector<8x256xf32>
    %c255_i32_66 = arith.constant 255 : i32
    %102 = tpu.dynamic_rotate %101 by %c255_i32_66 dim 1 : vector<8x256xf32>, i32 -> vector<8x256xf32>
    %103 = arith.mulf %102, %23 : vector<8x256xf32>
    %104 = arith.truncf %103 : vector<8x256xf32> to vector<8x256xbf16>
    %c40_67 = arith.constant 40 : index
    %c256_68 = arith.constant 256 : index
    %105 = vector.load %arg8[%c40_67, %c256_68] : memref<72x512xbf16, #tpu.memory_space<vmem>>, vector<8x256xbf16>
    tpu.vector_store %arg8[%c40_67, %c256_68], %104 {strides = array<i32>} : memref<72x512xbf16, #tpu.memory_space<vmem>>, vector<8x256xbf16>,
    %c0_69 = arith.constant 0 : index
    %c0_70 = arith.constant 0 : index
    %c0_71 = arith.constant 0 : index
    %106 = vector.load %arg1[%c0_69, %c0_70, %c0_71] : memref<2x8x256xf32, #tpu.memory_space<vmem>>, vector<1x8x256xf32>
    %107 = vector.shape_cast %106 : vector<1x8x256xf32> to vector<8x256xf32>
    %c241_i32 = arith.constant 241 : i32
    %108 = tpu.dynamic_rotate %107 by %c241_i32 dim 1 : vector<8x256xf32>, i32 -> vector<8x256xf32>
    %109 = arith.mulf %108, %27 : vector<8x256xf32>
    %110 = arith.truncf %109 : vector<8x256xf32> to vector<8x256xbf16>
    %c48 = arith.constant 48 : index
    %c0_72 = arith.constant 0 : index
    %111 = vector.load %arg8[%c48, %c0_72] : memref<72x512xbf16, #tpu.memory_space<vmem>>, vector<8x256xbf16>
    tpu.vector_store %arg8[%c48, %c0_72], %110 {strides = array<i32>} : memref<72x512xbf16, #tpu.memory_space<vmem>>, vector<8x256xbf16>,
    %c1_73 = arith.constant 1 : index
    %c0_74 = arith.constant 0 : index
    %c0_75 = arith.constant 0 : index
    %112 = vector.load %arg1[%c1_73, %c0_74, %c0_75] : memref<2x8x256xf32, #tpu.memory_space<vmem>>, vector<1x8x256xf32>
    %113 = vector.shape_cast %112 : vector<1x8x256xf32> to vector<8x256xf32>
    %c241_i32_76 = arith.constant 241 : i32
    %114 = tpu.dynamic_rotate %113 by %c241_i32_76 dim 1 : vector<8x256xf32>, i32 -> vector<8x256xf32>
    %115 = arith.mulf %114, %27 : vector<8x256xf32>
    %116 = arith.truncf %115 : vector<8x256xf32> to vector<8x256xbf16>
    %c48_77 = arith.constant 48 : index
    %c256_78 = arith.constant 256 : index
    %117 = vector.load %arg8[%c48_77, %c256_78] : memref<72x512xbf16, #tpu.memory_space<vmem>>, vector<8x256xbf16>
    tpu.vector_store %arg8[%c48_77, %c256_78], %116 {strides = array<i32>} : memref<72x512xbf16, #tpu.memory_space<vmem>>, vector<8x256xbf16>,
    %c0_79 = arith.constant 0 : index
    %c0_80 = arith.constant 0 : index
    %c0_81 = arith.constant 0 : index
    %118 = vector.load %arg1[%c0_79, %c0_80, %c0_81] : memref<2x8x256xf32, #tpu.memory_space<vmem>>, vector<1x8x256xf32>
    %119 = vector.shape_cast %118 : vector<1x8x256xf32> to vector<8x256xf32>
    %c240_i32 = arith.constant 240 : i32
    %120 = tpu.dynamic_rotate %119 by %c240_i32 dim 1 : vector<8x256xf32>, i32 -> vector<8x256xf32>
    %121 = arith.mulf %120, %31 : vector<8x256xf32>
    %122 = arith.truncf %121 : vector<8x256xf32> to vector<8x256xbf16>
    %c56 = arith.constant 56 : index
    %c0_82 = arith.constant 0 : index
    %123 = vector.load %arg8[%c56, %c0_82] : memref<72x512xbf16, #tpu.memory_space<vmem>>, vector<8x256xbf16>
    tpu.vector_store %arg8[%c56, %c0_82], %122 {strides = array<i32>} : memref<72x512xbf16, #tpu.memory_space<vmem>>, vector<8x256xbf16>,
    %c1_83 = arith.constant 1 : index
    %c0_84 = arith.constant 0 : index
    %c0_85 = arith.constant 0 : index
    %124 = vector.load %arg1[%c1_83, %c0_84, %c0_85] : memref<2x8x256xf32, #tpu.memory_space<vmem>>, vector<1x8x256xf32>
    %125 = vector.shape_cast %124 : vector<1x8x256xf32> to vector<8x256xf32>
    %c240_i32_86 = arith.constant 240 : i32
    %126 = tpu.dynamic_rotate %125 by %c240_i32_86 dim 1 : vector<8x256xf32>, i32 -> vector<8x256xf32>
    %127 = arith.mulf %126, %31 : vector<8x256xf32>
    %128 = arith.truncf %127 : vector<8x256xf32> to vector<8x256xbf16>
    %c56_87 = arith.constant 56 : index
    %c256_88 = arith.constant 256 : index
    %129 = vector.load %arg8[%c56_87, %c256_88] : memref<72x512xbf16, #tpu.memory_space<vmem>>, vector<8x256xbf16>
    tpu.vector_store %arg8[%c56_87, %c256_88], %128 {strides = array<i32>} : memref<72x512xbf16, #tpu.memory_space<vmem>>, vector<8x256xbf16>,
    %c0_89 = arith.constant 0 : index
    %c0_90 = arith.constant 0 : index
    %c0_91 = arith.constant 0 : index
    %130 = vector.load %arg1[%c0_89, %c0_90, %c0_91] : memref<2x8x256xf32, #tpu.memory_space<vmem>>, vector<1x8x256xf32>
    %131 = vector.shape_cast %130 : vector<1x8x256xf32> to vector<8x256xf32>
    %c239_i32 = arith.constant 239 : i32
    %132 = tpu.dynamic_rotate %131 by %c239_i32 dim 1 : vector<8x256xf32>, i32 -> vector<8x256xf32>
    %133 = arith.mulf %132, %35 : vector<8x256xf32>
    %134 = arith.truncf %133 : vector<8x256xf32> to vector<8x256xbf16>
    %c64 = arith.constant 64 : index
    %c0_92 = arith.constant 0 : index
    %135 = vector.load %arg8[%c64, %c0_92] : memref<72x512xbf16, #tpu.memory_space<vmem>>, vector<8x256xbf16>
    tpu.vector_store %arg8[%c64, %c0_92], %134 {strides = array<i32>} : memref<72x512xbf16, #tpu.memory_space<vmem>>, vector<8x256xbf16>,
    %c1_93 = arith.constant 1 : index
    %c0_94 = arith.constant 0 : index
    %c0_95 = arith.constant 0 : index
    %136 = vector.load %arg1[%c1_93, %c0_94, %c0_95] : memref<2x8x256xf32, #tpu.memory_space<vmem>>, vector<1x8x256xf32>
    %137 = vector.shape_cast %136 : vector<1x8x256xf32> to vector<8x256xf32>
    %c239_i32_96 = arith.constant 239 : i32
    %138 = tpu.dynamic_rotate %137 by %c239_i32_96 dim 1 : vector<8x256xf32>, i32 -> vector<8x256xf32>
    %139 = arith.mulf %138, %35 : vector<8x256xf32>
    %140 = arith.truncf %139 : vector<8x256xf32> to vector<8x256xbf16>
    %c64_97 = arith.constant 64 : index
    %c256_98 = arith.constant 256 : index
    %141 = vector.load %arg8[%c64_97, %c256_98] : memref<72x512xbf16, #tpu.memory_space<vmem>>, vector<8x256xbf16>
    tpu.vector_store %arg8[%c64_97, %c256_98], %140 {strides = array<i32>} : memref<72x512xbf16, #tpu.memory_space<vmem>>, vector<8x256xbf16>,
    %c0_99 = arith.constant 0 : index
    %c0_100 = arith.constant 0 : index
    %142 = vector.load %arg3[%c0_99, %c0_100] : memref<8x72xbf16, #tpu.memory_space<vmem>>, vector<8x72xbf16>
    %c0_101 = arith.constant 0 : index
    %c0_102 = arith.constant 0 : index
    %143 = vector.load %arg8[%c0_101, %c0_102] : memref<72x512xbf16, #tpu.memory_space<vmem>>, vector<72x512xbf16>
    %cst = arith.constant dense<0.000000e+00> : vector<8x512xf32>
    %144 = tpu.matmul %142, %143, %cst {dimension_numbers = #tpu.dot_dimension_numbers<[1], [0], [0], [1], [0, 0, 1, 1], [], []>} : vector<8x72xbf16>, vector<72x512xbf16>, vector<8x512xf32> -> vector<8x512xf32>
    %c0_103 = arith.constant 0 : index
    %c0_104 = arith.constant 0 : index
    %145 = vector.load %arg4[%c0_103, %c0_104] : memref<8x1xf32, #tpu.memory_space<vmem>>, vector<8x1xf32>
    %146 = vector.broadcast %145 : vector<8x1xf32> to vector<8x512xf32>
    %147 = arith.addf %144, %146 : vector<8x512xf32>
    %cst_105 = arith.constant 0.000000e+00 : f32
    %148 = vector.broadcast %cst_105 : f32 to vector<8x512xf32>
    %149 = arith.maximumf %147, %148 : vector<8x512xf32>
    %150 = vector.extract_strided_slice %149 {offsets = [0, 0], sizes = [8, 256], strides = [1, 1]} : vector<8x512xf32> to vector<8x256xf32>
    %c17_i32_106 = arith.constant 17 : i32
    %151 = tpu.dynamic_rotate %150 by %c17_i32_106 dim 1 : vector<8x256xf32>, i32 -> vector<8x256xf32>
    %152 = arith.mulf %151, %3 : vector<8x256xf32>
    %153 = arith.truncf %152 : vector<8x256xf32> to vector<8x256xbf16>
    %c0_107 = arith.constant 0 : index
    %c0_108 = arith.constant 0 : index
    %154 = vector.load %arg9[%c0_107, %c0_108] : memref<72x512xbf16, #tpu.memory_space<vmem>>, vector<8x256xbf16>
    tpu.vector_store %arg9[%c0_107, %c0_108], %153 {strides = array<i32>} : memref<72x512xbf16, #tpu.memory_space<vmem>>, vector<8x256xbf16>,
    %155 = vector.extract_strided_slice %149 {offsets = [0, 256], sizes = [8, 256], strides = [1, 1]} : vector<8x512xf32> to vector<8x256xf32>
    %c17_i32_109 = arith.constant 17 : i32
    %156 = tpu.dynamic_rotate %155 by %c17_i32_109 dim 1 : vector<8x256xf32>, i32 -> vector<8x256xf32>
    %157 = arith.mulf %156, %3 : vector<8x256xf32>
    %158 = arith.truncf %157 : vector<8x256xf32> to vector<8x256xbf16>
    %c0_110 = arith.constant 0 : index
    %c256_111 = arith.constant 256 : index
    %159 = vector.load %arg9[%c0_110, %c256_111] : memref<72x512xbf16, #tpu.memory_space<vmem>>, vector<8x256xbf16>
    tpu.vector_store %arg9[%c0_110, %c256_111], %158 {strides = array<i32>} : memref<72x512xbf16, #tpu.memory_space<vmem>>, vector<8x256xbf16>,
    %160 = vector.extract_strided_slice %149 {offsets = [0, 0], sizes = [8, 256], strides = [1, 1]} : vector<8x512xf32> to vector<8x256xf32>
    %c16_i32_112 = arith.constant 16 : i32
    %161 = tpu.dynamic_rotate %160 by %c16_i32_112 dim 1 : vector<8x256xf32>, i32 -> vector<8x256xf32>
    %162 = arith.mulf %161, %7 : vector<8x256xf32>
    %163 = arith.truncf %162 : vector<8x256xf32> to vector<8x256xbf16>
    %c8_113 = arith.constant 8 : index
    %c0_114 = arith.constant 0 : index
    %164 = vector.load %arg9[%c8_113, %c0_114] : memref<72x512xbf16, #tpu.memory_space<vmem>>, vector<8x256xbf16>
    tpu.vector_store %arg9[%c8_113, %c0_114], %163 {strides = array<i32>} : memref<72x512xbf16, #tpu.memory_space<vmem>>, vector<8x256xbf16>,
    %165 = vector.extract_strided_slice %149 {offsets = [0, 256], sizes = [8, 256], strides = [1, 1]} : vector<8x512xf32> to vector<8x256xf32>
    %c16_i32_115 = arith.constant 16 : i32
    %166 = tpu.dynamic_rotate %165 by %c16_i32_115 dim 1 : vector<8x256xf32>, i32 -> vector<8x256xf32>
    %167 = arith.mulf %166, %7 : vector<8x256xf32>
    %168 = arith.truncf %167 : vector<8x256xf32> to vector<8x256xbf16>
    %c8_116 = arith.constant 8 : index
    %c256_117 = arith.constant 256 : index
    %169 = vector.load %arg9[%c8_116, %c256_117] : memref<72x512xbf16, #tpu.memory_space<vmem>>, vector<8x256xbf16>
    tpu.vector_store %arg9[%c8_116, %c256_117], %168 {strides = array<i32>} : memref<72x512xbf16, #tpu.memory_space<vmem>>, vector<8x256xbf16>,
    %170 = vector.extract_strided_slice %149 {offsets = [0, 0], sizes = [8, 256], strides = [1, 1]} : vector<8x512xf32> to vector<8x256xf32>
    %c15_i32_118 = arith.constant 15 : i32
    %171 = tpu.dynamic_rotate %170 by %c15_i32_118 dim 1 : vector<8x256xf32>, i32 -> vector<8x256xf32>
    %172 = arith.mulf %171, %11 : vector<8x256xf32>
    %173 = arith.truncf %172 : vector<8x256xf32> to vector<8x256xbf16>
    %c16_119 = arith.constant 16 : index
    %c0_120 = arith.constant 0 : index
    %174 = vector.load %arg9[%c16_119, %c0_120] : memref<72x512xbf16, #tpu.memory_space<vmem>>, vector<8x256xbf16>
    tpu.vector_store %arg9[%c16_119, %c0_120], %173 {strides = array<i32>} : memref<72x512xbf16, #tpu.memory_space<vmem>>, vector<8x256xbf16>,
    %175 = vector.extract_strided_slice %149 {offsets = [0, 256], sizes = [8, 256], strides = [1, 1]} : vector<8x512xf32> to vector<8x256xf32>
    %c15_i32_121 = arith.constant 15 : i32
    %176 = tpu.dynamic_rotate %175 by %c15_i32_121 dim 1 : vector<8x256xf32>, i32 -> vector<8x256xf32>
    %177 = arith.mulf %176, %11 : vector<8x256xf32>
    %178 = arith.truncf %177 : vector<8x256xf32> to vector<8x256xbf16>
    %c16_122 = arith.constant 16 : index
    %c256_123 = arith.constant 256 : index
    %179 = vector.load %arg9[%c16_122, %c256_123] : memref<72x512xbf16, #tpu.memory_space<vmem>>, vector<8x256xbf16>
    tpu.vector_store %arg9[%c16_122, %c256_123], %178 {strides = array<i32>} : memref<72x512xbf16, #tpu.memory_space<vmem>>, vector<8x256xbf16>,
    %180 = vector.extract_strided_slice %149 {offsets = [0, 0], sizes = [8, 256], strides = [1, 1]} : vector<8x512xf32> to vector<8x256xf32>
    %c1_i32_124 = arith.constant 1 : i32
    %181 = tpu.dynamic_rotate %180 by %c1_i32_124 dim 1 : vector<8x256xf32>, i32 -> vector<8x256xf32>
    %182 = arith.mulf %181, %15 : vector<8x256xf32>
    %183 = arith.truncf %182 : vector<8x256xf32> to vector<8x256xbf16>
    %c24_125 = arith.constant 24 : index
    %c0_126 = arith.constant 0 : index
    %184 = vector.load %arg9[%c24_125, %c0_126] : memref<72x512xbf16, #tpu.memory_space<vmem>>, vector<8x256xbf16>
    tpu.vector_store %arg9[%c24_125, %c0_126], %183 {strides = array<i32>} : memref<72x512xbf16, #tpu.memory_space<vmem>>, vector<8x256xbf16>,
    %185 = vector.extract_strided_slice %149 {offsets = [0, 256], sizes = [8, 256], strides = [1, 1]} : vector<8x512xf32> to vector<8x256xf32>
    %c1_i32_127 = arith.constant 1 : i32
    %186 = tpu.dynamic_rotate %185 by %c1_i32_127 dim 1 : vector<8x256xf32>, i32 -> vector<8x256xf32>
    %187 = arith.mulf %186, %15 : vector<8x256xf32>
    %188 = arith.truncf %187 : vector<8x256xf32> to vector<8x256xbf16>
    %c24_128 = arith.constant 24 : index
    %c256_129 = arith.constant 256 : index
    %189 = vector.load %arg9[%c24_128, %c256_129] : memref<72x512xbf16, #tpu.memory_space<vmem>>, vector<8x256xbf16>
    tpu.vector_store %arg9[%c24_128, %c256_129], %188 {strides = array<i32>} : memref<72x512xbf16, #tpu.memory_space<vmem>>, vector<8x256xbf16>,
    %190 = vector.extract_strided_slice %149 {offsets = [0, 0], sizes = [8, 256], strides = [1, 1]} : vector<8x512xf32> to vector<8x256xf32>
    %191 = arith.mulf %190, %19 : vector<8x256xf32>
    %192 = arith.truncf %191 : vector<8x256xf32> to vector<8x256xbf16>
    %c32_130 = arith.constant 32 : index
    %c0_131 = arith.constant 0 : index
    %193 = vector.load %arg9[%c32_130, %c0_131] : memref<72x512xbf16, #tpu.memory_space<vmem>>, vector<8x256xbf16>
    tpu.vector_store %arg9[%c32_130, %c0_131], %192 {strides = array<i32>} : memref<72x512xbf16, #tpu.memory_space<vmem>>, vector<8x256xbf16>,
    %194 = vector.extract_strided_slice %149 {offsets = [0, 256], sizes = [8, 256], strides = [1, 1]} : vector<8x512xf32> to vector<8x256xf32>
    %195 = arith.mulf %194, %19 : vector<8x256xf32>
    %196 = arith.truncf %195 : vector<8x256xf32> to vector<8x256xbf16>
    %c32_132 = arith.constant 32 : index
    %c256_133 = arith.constant 256 : index
    %197 = vector.load %arg9[%c32_132, %c256_133] : memref<72x512xbf16, #tpu.memory_space<vmem>>, vector<8x256xbf16>
    tpu.vector_store %arg9[%c32_132, %c256_133], %196 {strides = array<i32>} : memref<72x512xbf16, #tpu.memory_space<vmem>>, vector<8x256xbf16>,
    %198 = vector.extract_strided_slice %149 {offsets = [0, 0], sizes = [8, 256], strides = [1, 1]} : vector<8x512xf32> to vector<8x256xf32>
    %c255_i32_134 = arith.constant 255 : i32
    %199 = tpu.dynamic_rotate %198 by %c255_i32_134 dim 1 : vector<8x256xf32>, i32 -> vector<8x256xf32>
    %200 = arith.mulf %199, %23 : vector<8x256xf32>
    %201 = arith.truncf %200 : vector<8x256xf32> to vector<8x256xbf16>
    %c40_135 = arith.constant 40 : index
    %c0_136 = arith.constant 0 : index
    %202 = vector.load %arg9[%c40_135, %c0_136] : memref<72x512xbf16, #tpu.memory_space<vmem>>, vector<8x256xbf16>
    tpu.vector_store %arg9[%c40_135, %c0_136], %201 {strides = array<i32>} : memref<72x512xbf16, #tpu.memory_space<vmem>>, vector<8x256xbf16>,
    %203 = vector.extract_strided_slice %149 {offsets = [0, 256], sizes = [8, 256], strides = [1, 1]} : vector<8x512xf32> to vector<8x256xf32>
    %c255_i32_137 = arith.constant 255 : i32
    %204 = tpu.dynamic_rotate %203 by %c255_i32_137 dim 1 : vector<8x256xf32>, i32 -> vector<8x256xf32>
    %205 = arith.mulf %204, %23 : vector<8x256xf32>
    %206 = arith.truncf %205 : vector<8x256xf32> to vector<8x256xbf16>
    %c40_138 = arith.constant 40 : index
    %c256_139 = arith.constant 256 : index
    %207 = vector.load %arg9[%c40_138, %c256_139] : memref<72x512xbf16, #tpu.memory_space<vmem>>, vector<8x256xbf16>
    tpu.vector_store %arg9[%c40_138, %c256_139], %206 {strides = array<i32>} : memref<72x512xbf16, #tpu.memory_space<vmem>>, vector<8x256xbf16>,
    %208 = vector.extract_strided_slice %149 {offsets = [0, 0], sizes = [8, 256], strides = [1, 1]} : vector<8x512xf32> to vector<8x256xf32>
    %c241_i32_140 = arith.constant 241 : i32
    %209 = tpu.dynamic_rotate %208 by %c241_i32_140 dim 1 : vector<8x256xf32>, i32 -> vector<8x256xf32>
    %210 = arith.mulf %209, %27 : vector<8x256xf32>
    %211 = arith.truncf %210 : vector<8x256xf32> to vector<8x256xbf16>
    %c48_141 = arith.constant 48 : index
    %c0_142 = arith.constant 0 : index
    %212 = vector.load %arg9[%c48_141, %c0_142] : memref<72x512xbf16, #tpu.memory_space<vmem>>, vector<8x256xbf16>
    tpu.vector_store %arg9[%c48_141, %c0_142], %211 {strides = array<i32>} : memref<72x512xbf16, #tpu.memory_space<vmem>>, vector<8x256xbf16>,
    %213 = vector.extract_strided_slice %149 {offsets = [0, 256], sizes = [8, 256], strides = [1, 1]} : vector<8x512xf32> to vector<8x256xf32>
    %c241_i32_143 = arith.constant 241 : i32
    %214 = tpu.dynamic_rotate %213 by %c241_i32_143 dim 1 : vector<8x256xf32>, i32 -> vector<8x256xf32>
    %215 = arith.mulf %214, %27 : vector<8x256xf32>
    %216 = arith.truncf %215 : vector<8x256xf32> to vector<8x256xbf16>
    %c48_144 = arith.constant 48 : index
    %c256_145 = arith.constant 256 : index
    %217 = vector.load %arg9[%c48_144, %c256_145] : memref<72x512xbf16, #tpu.memory_space<vmem>>, vector<8x256xbf16>
    tpu.vector_store %arg9[%c48_144, %c256_145], %216 {strides = array<i32>} : memref<72x512xbf16, #tpu.memory_space<vmem>>, vector<8x256xbf16>,
    %218 = vector.extract_strided_slice %149 {offsets = [0, 0], sizes = [8, 256], strides = [1, 1]} : vector<8x512xf32> to vector<8x256xf32>
    %c240_i32_146 = arith.constant 240 : i32
    %219 = tpu.dynamic_rotate %218 by %c240_i32_146 dim 1 : vector<8x256xf32>, i32 -> vector<8x256xf32>
    %220 = arith.mulf %219, %31 : vector<8x256xf32>
    %221 = arith.truncf %220 : vector<8x256xf32> to vector<8x256xbf16>
    %c56_147 = arith.constant 56 : index
    %c0_148 = arith.constant 0 : index
    %222 = vector.load %arg9[%c56_147, %c0_148] : memref<72x512xbf16, #tpu.memory_space<vmem>>, vector<8x256xbf16>
    tpu.vector_store %arg9[%c56_147, %c0_148], %221 {strides = array<i32>} : memref<72x512xbf16, #tpu.memory_space<vmem>>, vector<8x256xbf16>,
    %223 = vector.extract_strided_slice %149 {offsets = [0, 256], sizes = [8, 256], strides = [1, 1]} : vector<8x512xf32> to vector<8x256xf32>
    %c240_i32_149 = arith.constant 240 : i32
    %224 = tpu.dynamic_rotate %223 by %c240_i32_149 dim 1 : vector<8x256xf32>, i32 -> vector<8x256xf32>
    %225 = arith.mulf %224, %31 : vector<8x256xf32>
    %226 = arith.truncf %225 : vector<8x256xf32> to vector<8x256xbf16>
    %c56_150 = arith.constant 56 : index
    %c256_151 = arith.constant 256 : index
    %227 = vector.load %arg9[%c56_150, %c256_151] : memref<72x512xbf16, #tpu.memory_space<vmem>>, vector<8x256xbf16>
    tpu.vector_store %arg9[%c56_150, %c256_151], %226 {strides = array<i32>} : memref<72x512xbf16, #tpu.memory_space<vmem>>, vector<8x256xbf16>,
    %228 = vector.extract_strided_slice %149 {offsets = [0, 0], sizes = [8, 256], strides = [1, 1]} : vector<8x512xf32> to vector<8x256xf32>
    %c239_i32_152 = arith.constant 239 : i32
    %229 = tpu.dynamic_rotate %228 by %c239_i32_152 dim 1 : vector<8x256xf32>, i32 -> vector<8x256xf32>
    %230 = arith.mulf %229, %35 : vector<8x256xf32>
    %231 = arith.truncf %230 : vector<8x256xf32> to vector<8x256xbf16>
    %c64_153 = arith.constant 64 : index
    %c0_154 = arith.constant 0 : index
    %232 = vector.load %arg9[%c64_153, %c0_154] : memref<72x512xbf16, #tpu.memory_space<vmem>>, vector<8x256xbf16>
    tpu.vector_store %arg9[%c64_153, %c0_154], %231 {strides = array<i32>} : memref<72x512xbf16, #tpu.memory_space<vmem>>, vector<8x256xbf16>,
    %233 = vector.extract_strided_slice %149 {offsets = [0, 256], sizes = [8, 256], strides = [1, 1]} : vector<8x512xf32> to vector<8x256xf32>
    %c239_i32_155 = arith.constant 239 : i32
    %234 = tpu.dynamic_rotate %233 by %c239_i32_155 dim 1 : vector<8x256xf32>, i32 -> vector<8x256xf32>
    %235 = arith.mulf %234, %35 : vector<8x256xf32>
    %236 = arith.truncf %235 : vector<8x256xf32> to vector<8x256xbf16>
    %c64_156 = arith.constant 64 : index
    %c256_157 = arith.constant 256 : index
    %237 = vector.load %arg9[%c64_156, %c256_157] : memref<72x512xbf16, #tpu.memory_space<vmem>>, vector<8x256xbf16>
    tpu.vector_store %arg9[%c64_156, %c256_157], %236 {strides = array<i32>} : memref<72x512xbf16, #tpu.memory_space<vmem>>, vector<8x256xbf16>,
    %c0_158 = arith.constant 0 : index
    %c0_159 = arith.constant 0 : index
    %238 = vector.load %arg5[%c0_158, %c0_159] : memref<16x72xbf16, #tpu.memory_space<vmem>>, vector<16x72xbf16>
    %c0_160 = arith.constant 0 : index
    %c0_161 = arith.constant 0 : index
    %239 = vector.load %arg9[%c0_160, %c0_161] : memref<72x512xbf16, #tpu.memory_space<vmem>>, vector<72x512xbf16>
    %cst_162 = arith.constant dense<0.000000e+00> : vector<16x512xf32>
    %240 = tpu.matmul %238, %239, %cst_162 {dimension_numbers = #tpu.dot_dimension_numbers<[1], [0], [0], [1], [0, 0, 1, 1], [], []>} : vector<16x72xbf16>, vector<72x512xbf16>, vector<16x512xf32> -> vector<16x512xf32>
    %c0_163 = arith.constant 0 : index
    %c0_164 = arith.constant 0 : index
    %241 = vector.load %arg6[%c0_163, %c0_164] : memref<16x1xf32, #tpu.memory_space<vmem>>, vector<16x1xf32>
    %242 = vector.broadcast %241 : vector<16x1xf32> to vector<16x512xf32>
    %243 = arith.addf %240, %242 : vector<16x512xf32>
    %cst_165 = arith.constant 0.000000e+00 : f32
    %244 = vector.broadcast %cst_165 : f32 to vector<16x512xf32>
    %245 = arith.maximumf %243, %244 : vector<16x512xf32>
    %246 = vector.extract_strided_slice %245 {offsets = [0, 0], sizes = [16, 256], strides = [1, 1]} : vector<16x512xf32> to vector<16x256xf32>
    %c0_166 = arith.constant 0 : index
    %c0_167 = arith.constant 0 : index
    %c0_168 = arith.constant 0 : index
    %247 = vector.load %arg7[%c0_166, %c0_167, %c0_168] : memref<2x16x256xf32, #tpu.memory_space<vmem>>, vector<1x16x256xf32>
    %248 = vector.shape_cast %247 : vector<1x16x256xf32> to vector<16x256xf32>
    %249 = vector.shape_cast %246 : vector<16x256xf32> to vector<1x16x256xf32>
    tpu.vector_store %arg7[%c0_166, %c0_167, %c0_168], %249 {strides = array<i32>} : memref<2x16x256xf32, #tpu.memory_space<vmem>>, vector<1x16x256xf32>,
    %250 = vector.extract_strided_slice %245 {offsets = [0, 256], sizes = [16, 256], strides = [1, 1]} : vector<16x512xf32> to vector<16x256xf32>
    %c1_169 = arith.constant 1 : index
    %c0_170 = arith.constant 0 : index
    %c0_171 = arith.constant 0 : index
    %251 = vector.load %arg7[%c1_169, %c0_170, %c0_171] : memref<2x16x256xf32, #tpu.memory_space<vmem>>, vector<1x16x256xf32>
    %252 = vector.shape_cast %251 : vector<1x16x256xf32> to vector<16x256xf32>
    %253 = vector.shape_cast %250 : vector<16x256xf32> to vector<1x16x256xf32>
    tpu.vector_store %arg7[%c1_169, %c0_170, %c0_171], %253 {strides = array<i32>} : memref<2x16x256xf32, #tpu.memory_space<vmem>>, vector<1x16x256xf32>,
    return
  }
  func.func @transform_0(%arg0: i32) -> (i32, i32, i32) {
    %c0_i32 = arith.constant 0 : i32
    %c0_i32_0 = arith.constant 0 : i32
    %c0_i32_1 = arith.constant 0 : i32
    return %arg0, %c0_i32, %c0_i32_0 : i32, i32, i32
  }
  func.func @transform_1(%arg0: i32) -> (i32, i32) {
    %c0_i32 = arith.constant 0 : i32
    %c0_i32_0 = arith.constant 0 : i32
    %c0_i32_1 = arith.constant 0 : i32
    return %c0_i32, %c0_i32_0 : i32, i32
  }
  func.func @transform_2(%arg0: i32) -> (i32, i32) {
    %c0_i32 = arith.constant 0 : i32
    %c0_i32_0 = arith.constant 0 : i32
    %c0_i32_1 = arith.constant 0 : i32
    return %c0_i32, %c0_i32_0 : i32, i32
  }
  func.func @transform_3(%arg0: i32) -> (i32, i32) {
    %c0_i32 = arith.constant 0 : i32
    %c0_i32_0 = arith.constant 0 : i32
    %c0_i32_1 = arith.constant 0 : i32
    return %c0_i32, %c0_i32_0 : i32, i32
  }
  func.func @transform_4(%arg0: i32) -> (i32, i32) {
    %c0_i32 = arith.constant 0 : i32
    %c0_i32_0 = arith.constant 0 : i32
    %c0_i32_1 = arith.constant 0 : i32
    return %c0_i32, %c0_i32_0 : i32, i32
  }
  func.func @transform_5(%arg0: i32) -> (i32, i32) {
    %c0_i32 = arith.constant 0 : i32
    %c0_i32_0 = arith.constant 0 : i32
    %c0_i32_1 = arith.constant 0 : i32
    return %c0_i32, %c0_i32_0 : i32, i32
  }
  func.func @transform_6(%arg0: i32) -> (i32, i32, i32) {
    %c0_i32 = arith.constant 0 : i32
    %c0_i32_0 = arith.constant 0 : i32
    %c0_i32_1 = arith.constant 0 : i32
    return %arg0, %c0_i32, %c0_i32_0 : i32, i32, i32
  }
}

</mosaic_0001>

<llo_original>
// kernel: decoder_block_forward.1
$region0: #{decoder_block_forward.1}
  #allocation0 [shape = 'u32[]', space=smem, size = 0x4, offset = 0x4, fixed_abs, tag = 'smem constant byte address 0x4 - core index']
  #allocation1 [shape = 'u32[144,128]{1,0:T(1,128)}', space=vmem, size = 0x12000, scoped, tag = 'internal scratch']
  #allocation2 [shape = 'bf16[72,512]{1,0:T(8,128)(2,1)}', space=vmem, size = 0x12000, scoped, tag = 'scratch operand']
  #allocation3 [shape = 'bf16[72,512]{1,0:T(8,128)(2,1)}', space=vmem, size = 0x12000, scoped, tag = 'scratch operand']
  %s0 = inlined_call_operand.vmem [shape: f32[4,8,256], index: 0, kind: input, shape index: {}]
  %s1 = inlined_call_operand.hbm [shape: f32[16,256], index: 1, kind: input, shape index: {}]
  %s2 = inlined_call_operand.vmem [shape: bf16[8,72], index: 2, kind: input, shape index: {}]
  %s3 = inlined_call_operand.vmem [shape: f32[8,1], index: 3, kind: input, shape index: {}]
  %s4 = inlined_call_operand.vmem [shape: bf16[16,72], index: 4, kind: input, shape index: {}]
  %s5 = inlined_call_operand.vmem [shape: f32[16,1], index: 5, kind: input, shape index: {}]
  %s6 = inlined_call_operand.vmem [shape: f32[4,16,256], index: 6, kind: output, shape index: {}]
  %s7 = sld [smem:[#allocation0]]
  $region61: #{decoder_block_forward.1} parent=0
    _
  %s9 = ssub.s32 1, %s7
  %s10 = scalar_select 0, %s9, %s7
  $region1: #{decoder_block_forward.1} parent=0
    #allocation4 [shape = 'u8[16384]{0}', space=vmem, size = 0x4000, scoped, tag = 'input window, operand 1, single buffered']
    #allocation5 [shape = 's32[2]{0}', space=sflag, size = 0x8, scoped, tag = 'scoped memory for decoder_block_forward.1']
    %11 = vsyncpa [#allocation5], 0
    loop: start=0, step=1, limit=4
    $region2: #{decoder_block_forward.1} parent=1 // loop_pre_header
      _
    $region3: #{decoder_block_forward.1} parent=1 // loop_header
      %s13 = sphi 0, %s17
      %p14 = scmp.ge.s32.totalorder %s13, 4
      %s23 = sphi 0, %s25
      %s26 = sphi 0, %s23
      %s27 = sphi 0, %s26
      %s43 = sphi 0, %s27
      %s47 = sphi 0, %s47
      %s49 = sphi 0, %s47
      %s50 = sphi 0, %s49
      %s64 = sphi 0, %s50
      %s68 = sphi 0, %s68
      %s70 = sphi 0, %s68
      %s71 = sphi 0, %s70
      %s85 = sphi 0, %s71
      %s89 = sphi 0, %s89
      %s91 = sphi 0, %s89
      %s92 = sphi 0, %s91
      %s106 = sphi 0, %s92
      %s110 = sphi 0, %s110
      %s112 = sphi 0, %s110
      %s113 = sphi 0, %s112
      %s127 = sphi 0, %s113
      %s131 = sphi 0, %s131
      %s133 = sphi 0, %s131
      %s134 = sphi 0, %s133
      %s148 = sphi 0, %s134
      %s154 = sphi 0, %s156
      %s157 = sphi 0, %s154
      %s158 = sphi 0, %s157
      %s174 = sphi 0, %s158
    $region4: #{decoder_block_forward.1} parent=1 // loop_header_branch
      %16 = sbr.rel (%p14) target = $region8
    $region5: #{decoder_block_forward.1} parent=1 // loop_body
      %s18 = ssub.s32 %s13, 1
      %s19 = ssub.s32 %s13, 2
      %s20 = sadd.s32 %s13, 1
      %s21 = ssub.s32 %s13, %s20
      %p22 = scmp.eq.s32.totalorder %s21, 0
      %s24 = sadd.s32 %s23, 1
      %s25 = scalar_select %p22, %s23, %s24
      %p28 = pneg %p22
      %p29 = scmp.eq.s32.totalorder %s13, 1
      %p30 = por %p28, %p29
      %p31 = scmp.ne.s32.totalorder %s23, %s26
      %p32 = scmp.eq.s32.totalorder %s13, 0
      %p33 = por %p31, %p32
      %p34 = scmp.ne.s32.totalorder %s23, %s26
      %p35 = scmp.eq.s32.totalorder %s18, 1
      %p36 = por %p34, %p35
      %p37 = scmp.ne.s32.totalorder %s26, %s27
      %p38 = scmp.eq.s32.totalorder %s18, 0
      %p39 = por %p37, %p38
      %p40 = scmp.ne.s32.totalorder %s26, %s27
      %p41 = scmp.eq.s32.totalorder %s19, 1
      %p42 = por %p40, %p41
      %p44 = scmp.ne.s32.totalorder %s27, %s43
      %p45 = scmp.eq.s32.totalorder %s19, 0
      %p46 = por %p44, %p45
      %s48 = sadd.s32 %s47, 1
      %p51 = scmp.eq.s32.totalorder %s13, 1
      %p52 = scmp.ne.s32.totalorder %s47, %s49
      %p53 = scmp.eq.s32.totalorder %s13, 0
      %p54 = por %p52, %p53
      %p55 = scmp.ne.s32.totalorder %s47, %s49
      %p56 = scmp.eq.s32.totalorder %s18, 1
      %p57 = por %p55, %p56
      %p58 = scmp.ne.s32.totalorder %s49, %s50
      %p59 = scmp.eq.s32.totalorder %s18, 0
      %p60 = por %p58, %p59
      %p61 = scmp.ne.s32.totalorder %s49, %s50
      %p62 = scmp.eq.s32.totalorder %s19, 1
      %p63 = por %p61, %p62
      %p65 = scmp.ne.s32.totalorder %s50, %s64
      %p66 = scmp.eq.s32.totalorder %s19, 0
      %p67 = por %p65, %p66
      %s69 = sadd.s32 %s68, 1
      %p72 = scmp.eq.s32.totalorder %s13, 1
      %p73 = scmp.ne.s32.totalorder %s68, %s70
      %p74 = scmp.eq.s32.totalorder %s13, 0
      %p75 = por %p73, %p74
      %p76 = scmp.ne.s32.totalorder %s68, %s70
      %p77 = scmp.eq.s32.totalorder %s18, 1
      %p78 = por %p76, %p77
      %p79 = scmp.ne.s32.totalorder %s70, %s71
      %p80 = scmp.eq.s32.totalorder %s18, 0
      %p81 = por %p79, %p80
      %p82 = scmp.ne.s32.totalorder %s70, %s71
      %p83 = scmp.eq.s32.totalorder %s19, 1
      %p84 = por %p82, %p83
      %p86 = scmp.ne.s32.totalorder %s71, %s85
      %p87 = scmp.eq.s32.totalorder %s19, 0
      %p88 = por %p86, %p87
      %s90 = sadd.s32 %s89, 1
      %p93 = scmp.eq.s32.totalorder %s13, 1
      %p94 = scmp.ne.s32.totalorder %s89, %s91
      %p95 = scmp.eq.s32.totalorder %s13, 0
      %p96 = por %p94, %p95
      %p97 = scmp.ne.s32.totalorder %s89, %s91
      %p98 = scmp.eq.s32.totalorder %s18, 1
      %p99 = por %p97, %p98
      %p100 = scmp.ne.s32.totalorder %s91, %s92
      %p101 = scmp.eq.s32.totalorder %s18, 0
      %p102 = por %p100, %p101
      %p103 = scmp.ne.s32.totalorder %s91, %s92
      %p104 = scmp.eq.s32.totalorder %s19, 1
      %p105 = por %p103, %p104
      %p107 = scmp.ne.s32.totalorder %s92, %s106
      %p108 = scmp.eq.s32.totalorder %s19, 0
      %p109 = por %p107, %p108
      %s111 = sadd.s32 %s110, 1
      %p114 = scmp.eq.s32.totalorder %s13, 1
      %p115 = scmp.ne.s32.totalorder %s110, %s112
      %p116 = scmp.eq.s32.totalorder %s13, 0
      %p117 = por %p115, %p116
      %p118 = scmp.ne.s32.totalorder %s110, %s112
      %p119 = scmp.eq.s32.totalorder %s18, 1
      %p120 = por %p118, %p119
      %p121 = scmp.ne.s32.totalorder %s112, %s113
      %p122 = scmp.eq.s32.totalorder %s18, 0
      %p123 = por %p121, %p122
      %p124 = scmp.ne.s32.totalorder %s112, %s113
      %p125 = scmp.eq.s32.totalorder %s19, 1
      %p126 = por %p124, %p125
      %p128 = scmp.ne.s32.totalorder %s113, %s127
      %p129 = scmp.eq.s32.totalorder %s19, 0
      %p130 = por %p128, %p129
      %s132 = sadd.s32 %s131, 1
      %p135 = scmp.eq.s32.totalorder %s13, 1
      %p136 = scmp.ne.s32.totalorder %s131, %s133
      %p137 = scmp.eq.s32.totalorder %s13, 0
      %p138 = por %p136, %p137
      %p139 = scmp.ne.s32.totalorder %s131, %s133
      %p140 = scmp.eq.s32.totalorder %s18, 1
      %p141 = por %p139, %p140
      %p142 = scmp.ne.s32.totalorder %s133, %s134
      %p143 = scmp.eq.s32.totalorder %s18, 0
      %p144 = por %p142, %p143
      %p145 = scmp.ne.s32.totalorder %s133, %s134
      %p146 = scmp.eq.s32.totalorder %s19, 1
      %p147 = por %p145, %p146
      %p149 = scmp.ne.s32.totalorder %s134, %s148
      %p150 = scmp.eq.s32.totalorder %s19, 0
      %p151 = por %p149, %p150
      %s152 = ssub.s32 %s13, %s20
      %p153 = scmp.eq.s32.totalorder %s152, 0
      %s155 = sadd.s32 %s154, 1
      %s156 = scalar_select %p153, %s154, %s155
      %p159 = pneg %p153
      %p160 = scmp.eq.s32.totalorder %s13, 1
      %p161 = por %p159, %p160
      %p162 = scmp.ne.s32.totalorder %s154, %s157
      %p163 = scmp.eq.s32.totalorder %s13, 0
      %p164 = por %p162, %p163
      %p165 = scmp.ne.s32.totalorder %s154, %s157
      %p166 = scmp.eq.s32.totalorder %s18, 1
      %p167 = por %p165, %p166
      %p168 = scmp.ne.s32.totalorder %s157, %s158
      %p169 = scmp.eq.s32.totalorder %s18, 0
      %p170 = por %p168, %p169
      %p171 = scmp.ne.s32.totalorder %s157, %s158
      %p172 = scmp.eq.s32.totalorder %s19, 1
      %p173 = por %p171, %p172
      %p175 = scmp.ne.s32.totalorder %s158, %s174
      %p176 = scmp.eq.s32.totalorder %s19, 0
      %p177 = por %p175, %p176
      %p178 = scmp.le.s32.totalorder 1, %s13
      %p179 = scmp.lt.s32.totalorder %s13, 3
      %p180 = pnand %p178, %p179
      %p181 = pneg %p180
      // Predicated region
      $region9: #{decoder_block_forward.1} parent=5 // pred_check
        _
      $region10: #{decoder_block_forward.1} parent=5 // pred_check_branch
        %183 = sbr.rel (%p180) target = $region12
      $region11: #{decoder_block_forward.1} parent=5 // pred_region
        %s184 = ssub.s32 %s13, 1
        // Predicated region
        $region13: #{decoder_block_forward.1} parent=11 // pred_check
          %p185 = pneg %p60
        $region14: #{decoder_block_forward.1} parent=11 // pred_check_branch
          %187 = sbr.rel (%p185) target = $region16
        $region15: #{decoder_block_forward.1} parent=11 // pred_region
          %s189 = ssub.s32 512, 512
          %190 = vsyncadd [#allocation5], %s189
          %s191 = sshll.u32 [#allocation4], 4
          %s192 = int_to_ptr.vmem [resolvable:$true] %s191
          %197 = dma.hbm_to_vmem [thread:$0]  %s1, 512, %s192, [#allocation5], 256, 256, 16
        $region16: #{decoder_block_forward.1} parent=11 // pred_fallthru
          _
        // Predicated region
        $region17: #{decoder_block_forward.1} parent=11 // pred_check
          %p198 = pneg %p81
        $region18: #{decoder_block_forward.1} parent=11 // pred_check_branch
          %200 = sbr.rel (%p198) target = $region20
        $region19: #{decoder_block_forward.1} parent=11 // pred_region
          _
        $region20: #{decoder_block_forward.1} parent=11 // pred_fallthru
          _
        // Predicated region
        $region21: #{decoder_block_forward.1} parent=11 // pred_check
          %p201 = pneg %p102
        $region22: #{decoder_block_forward.1} parent=11 // pred_check_branch
          %203 = sbr.rel (%p201) target = $region24
        $region23: #{decoder_block_forward.1} parent=11 // pred_region
          _
        $region24: #{decoder_block_forward.1} parent=11 // pred_fallthru
          _
        // Predicated region
        $region25: #{decoder_block_forward.1} parent=11 // pred_check
          %p204 = pneg %p123
        $region26: #{decoder_block_forward.1} parent=11 // pred_check_branch
          %206 = sbr.rel (%p204) target = $region28
        $region27: #{decoder_block_forward.1} parent=11 // pred_region
          _
        $region28: #{decoder_block_forward.1} parent=11 // pred_fallthru
          _
        // Predicated region
        $region29: #{decoder_block_forward.1} parent=11 // pred_check
          %p207 = pneg %p144
        $region30: #{decoder_block_forward.1} parent=11 // pred_check_branch
          %209 = sbr.rel (%p207) target = $region32
        $region31: #{decoder_block_forward.1} parent=11 // pred_region
          _
        $region32: #{decoder_block_forward.1} parent=11 // pred_fallthru
          _
      $region12: #{decoder_block_forward.1} parent=5 // pred_fallthru
        _
      %p210 = scmp.lt.s32.totalorder %s13, 2
      // Predicated region
      $region33: #{decoder_block_forward.1} parent=5 // pred_check
        %p211 = pneg %p210
      $region34: #{decoder_block_forward.1} parent=5 // pred_check_branch
        %213 = sbr.rel (%p211) target = $region36
      $region35: #{decoder_block_forward.1} parent=5 // pred_region
        // Predicated region
        $region37: #{decoder_block_forward.1} parent=35 // pred_check
          %p214 = pneg %p33
        $region38: #{decoder_block_forward.1} parent=35 // pred_check_branch
          %216 = sbr.rel (%p214) target = $region40
        $region39: #{decoder_block_forward.1} parent=35 // pred_region
          %s217 = smul.u32 2, %s13
          %p218 = scmp.lt.s32.totalorder %s217, 3
          %s219 = scalar_select %p218, %s217, 3
          %s220 = smul.addr %s219, 2
          %s221 = smul.addr %s220, 8
          %s222 = scalar_lea.vmem %s0, %s221
          %s223 = smul.u32 2, %s13
        $region40: #{decoder_block_forward.1} parent=35 // pred_fallthru
          _
      $region36: #{decoder_block_forward.1} parent=5 // pred_fallthru
        _
      %p224 = scmp.le.s32.totalorder 1, %s13
      %p225 = scmp.lt.s32.totalorder %s13, 3
      %p226 = pnand %p224, %p225
      %p227 = pneg %p226
      // Predicated region
      $region41: #{decoder_block_forward.1} parent=5 // pred_check
        _
      $region42: #{decoder_block_forward.1} parent=5 // pred_check_branch
        %229 = sbr.rel (%p226) target = $region44
      $region43: #{decoder_block_forward.1} parent=5 // pred_region
        %s230 = ssub.s32 %s13, 1
        // Predicated region
        $region45: #{decoder_block_forward.1} parent=43 // pred_check
          %p231 = pneg %p60
        $region46: #{decoder_block_forward.1} parent=43 // pred_check_branch
          %233 = sbr.rel (%p231) target = $region48
        $region47: #{decoder_block_forward.1} parent=43 // pred_region
          %234 = dma.done [#allocation5], 512
        $region48: #{decoder_block_forward.1} parent=43 // pred_fallthru
          _
        %s235 = smul.u32 2, %s18
        %p236 = scmp.lt.s32.totalorder %s235, 3
        %s237 = scalar_select %p236, %s235, 3
        %s238 = smul.addr %s237, 2
        %s239 = smul.addr %s238, 8
        %s240 = scalar_lea.vmem %s0, %s239
        %p241 = pneg %p39
        %p242 = pneg %p36
        %p243 = pneg %p60
        %p244 = pneg %p57
        %p245 = pneg %p81
        %p246 = pneg %p78
        %p247 = pneg %p102
        %p248 = pneg %p99
        %p249 = pneg %p123
        %p250 = pneg %p120
        %p251 = pneg %p144
        %p252 = pneg %p141
        %p253 = pneg %p170
        %p254 = pneg %p167
        %s255 = smul.u32 2, %s18
        %p256 = scmp.lt.s32.totalorder %s255, 3
        %s257 = scalar_select %p256, %s255, 3
        %s258 = smul.addr %s257, 4
        %s259 = smul.addr %s258, 8
        %s260 = scalar_lea.vmem %s6, %s259
        %s261 = smul.u32 2, %s18
        %p262 = scmp.lt.s32.totalorder %s261, 3
        %s263 = scalar_select %p262, %s261, 3
        %s264 = smul.addr %s263, 2
        %s265 = smul.addr %s264, 8
        %s266 = scalar_lea.vmem %s0, %s265
        %s267 = smul.u32 2, %s18
        %s268 = smul.u32 2, %s18
        %p269 = scmp.lt.s32.totalorder %s268, 3
        %s270 = scalar_select %p269, %s268, 3
        %s271 = smul.addr %s270, 4
        %s272 = smul.addr %s271, 8
        %s273 = scalar_lea.vmem %s6, %s272
        %s274 = smul.u32 2, %s18
        %v276 = vld [vmem:[#allocation4] ss:$8 sm:$0x3]
        %v278 = vlaneseq
        %v279 = vshrl.u32 %v278, 7
        %v280 = vsub.s32 0, %v279
        %v281 = vrot.slane %v276, %v280
        %v282 = vlaneseq
        %v283 = vshrl.u32 %v282, 7
        %v284 = vsub.s32 1, %v283
        %v285 = vrot.slane %v276, %v284
        %s288 = scalar_lea.vmem [#allocation4], 1
        %v289 = vld [vmem:[%s288] ss:$8 sm:$0x3]
        %v291 = vlaneseq
        %v292 = vshrl.u32 %v291, 7
        %v293 = vsub.s32 0, %v292
        %v294 = vrot.slane %v289, %v293
        %v295 = vlaneseq
        %v296 = vshrl.u32 %v295, 7
        %v297 = vsub.s32 1, %v296
        %v298 = vrot.slane %v289, %v297
        %s301 = scalar_lea.vmem [#allocation4], 2
        %v302 = vld [vmem:[%s301] ss:$8 sm:$0x3]
        %v304 = vlaneseq
        %v305 = vshrl.u32 %v304, 7
        %v306 = vsub.s32 0, %v305
        %v307 = vrot.slane %v302, %v306
        %v308 = vlaneseq
        %v309 = vshrl.u32 %v308, 7
        %v310 = vsub.s32 1, %v309
        %v311 = vrot.slane %v302, %v310
        %s314 = scalar_lea.vmem [#allocation4], 3
        %v315 = vld [vmem:[%s314] ss:$8 sm:$0x3]
        %v317 = vlaneseq
        %v318 = vshrl.u32 %v317, 7
        %v319 = vsub.s32 0, %v318
        %v320 = vrot.slane %v315, %v319
        %v321 = vlaneseq
        %v322 = vshrl.u32 %v321, 7
        %v323 = vsub.s32 1, %v322
        %v324 = vrot.slane %v315, %v323
        %s327 = scalar_lea.vmem [#allocation4], 4
        %v328 = vld [vmem:[%s327] ss:$8 sm:$0x3]
        %v330 = vlaneseq
        %v331 = vshrl.u32 %v330, 7
        %v332 = vsub.s32 0, %v331
        %v333 = vrot.slane %v328, %v332
        %v334 = vlaneseq
        %v335 = vshrl.u32 %v334, 7
        %v336 = vsub.s32 1, %v335
        %v337 = vrot.slane %v328, %v336
        %s340 = scalar_lea.vmem [#allocation4], 5
        %v341 = vld [vmem:[%s340] ss:$8 sm:$0x3]
        %v343 = vlaneseq
        %v344 = vshrl.u32 %v343, 7
        %v345 = vsub.s32 0, %v344
        %v346 = vrot.slane %v341, %v345
        %v347 = vlaneseq
        %v348 = vshrl.u32 %v347, 7
        %v349 = vsub.s32 1, %v348
        %v350 = vrot.slane %v341, %v349
        %s353 = scalar_lea.vmem [#allocation4], 6
        %v354 = vld [vmem:[%s353] ss:$8 sm:$0x3]
        %v356 = vlaneseq
        %v357 = vshrl.u32 %v356, 7
        %v358 = vsub.s32 0, %v357
        %v359 = vrot.slane %v354, %v358
        %v360 = vlaneseq
        %v361 = vshrl.u32 %v360, 7
        %v362 = vsub.s32 1, %v361
        %v363 = vrot.slane %v354, %v362
        %s366 = scalar_lea.vmem [#allocation4], 7
        %v367 = vld [vmem:[%s366] ss:$8 sm:$0x3]
        %v369 = vlaneseq
        %v370 = vshrl.u32 %v369, 7
        %v371 = vsub.s32 0, %v370
        %v372 = vrot.slane %v367, %v371
        %v373 = vlaneseq
        %v374 = vshrl.u32 %v373, 7
        %v375 = vsub.s32 1, %v374
        %v376 = vrot.slane %v367, %v375
        %s379 = scalar_lea.vmem [#allocation4], 16
        %v380 = vld [vmem:[%s379] ss:$8 sm:$0x3]
        %v382 = vlaneseq
        %v383 = vshrl.u32 %v382, 7
        %v384 = vsub.s32 0, %v383
        %v385 = vrot.slane %v380, %v384
        %v386 = vlaneseq
        %v387 = vshrl.u32 %v386, 7
        %v388 = vsub.s32 1, %v387
        %v389 = vrot.slane %v380, %v388
        %v392 = vld [vmem:[%s266] sm:$0xff]
        %v393 = vld [vmem:[%s266 + $0x8] sm:$0xff]
        %394 = vrot.lane.b32.xlu0 %v392, 17
        %v395 = vpop.permute.xlu0 %394
        %396 = vrot.lane.b32.xlu0 %v393, 17
        %v397 = vpop.permute.xlu0 %396
        %v398 = vlaneseq
        %v399 = vand.u32 %v398, 127
        %vm400 = vcmp.lt.s32.totalorder %v399, 17
        %v401 = vsel %vm400, %v395, %v397
        %v402 = vsel %vm400, %v397, %v395
        %v403 = vmul.f32 %v402, %v281
        %v404 = vmul.f32 %v401, %v285
        %v405 = vpack.c.bf16 %v403, %v403
        %v406 = vpack.c.bf16 %v404, %v404
        %v409 = vunpack.c.l.b16 %v405
        %v410 = vunpack.c.l.b16 %v406
        %v411 = vpack.c.b16 %v410, %v409
        %413 = vst [vmem:[#allocation2] sm:$0xff] %v411
        %s414 = scalar_lea.vmem %s266, 16
        %v415 = vld [vmem:[%s414] sm:$0xff]
        %v416 = vld [vmem:[%s414 + $0x8] sm:$0xff]
        %417 = vrot.lane.b32.xlu0 %v415, 17
        %v418 = vpop.permute.xlu0 %417
        %419 = vrot.lane.b32.xlu0 %v416, 17
        %v420 = vpop.permute.xlu0 %419
        %v421 = vsel %vm400, %v418, %v420
        %v422 = vsel %vm400, %v420, %v418
        %v423 = vmul.f32 %v422, %v281
        %v424 = vmul.f32 %v421, %v285
        %v425 = vpack.c.bf16 %v423, %v423
        %v426 = vpack.c.bf16 %v424, %v424
        %v429 = vunpack.c.l.b16 %v425
        %v430 = vunpack.c.l.b16 %v426
        %v431 = vpack.c.b16 %v430, %v429
        %433 = vst [vmem:[#allocation2 + $0x8] sm:$0xff] %v431
        %v434 = vld [vmem:[%s266] sm:$0xff]
        %v435 = vld [vmem:[%s266 + $0x8] sm:$0xff]
        %436 = vrot.lane.b32.xlu0 %v434, 16
        %v437 = vpop.permute.xlu0 %436
        %438 = vrot.lane.b32.xlu0 %v435, 16
        %v439 = vpop.permute.xlu0 %438
        %vm440 = vcmp.lt.s32.totalorder %v399, 16
        %v441 = vsel %vm440, %v437, %v439
        %v442 = vsel %vm440, %v439, %v437
        %v443 = vmul.f32 %v442, %v294
        %v444 = vmul.f32 %v441, %v298
        %v445 = vpack.c.bf16 %v443, %v443
        %v446 = vpack.c.bf16 %v444, %v444
        %v449 = vunpack.c.l.b16 %v445
        %v450 = vunpack.c.l.b16 %v446
        %v451 = vpack.c.b16 %v450, %v449
        %453 = vst [vmem:[#allocation2 + $0x10] sm:$0xff] %v451
        %v454 = vld [vmem:[%s414] sm:$0xff]
        %v455 = vld [vmem:[%s414 + $0x8] sm:$0xff]
        %456 = vrot.lane.b32.xlu0 %v454, 16
        %v457 = vpop.permute.xlu0 %456
        %458 = vrot.lane.b32.xlu0 %v455, 16
        %v459 = vpop.permute.xlu0 %458
        %v460 = vsel %vm440, %v457, %v459
        %v461 = vsel %vm440, %v459, %v457
        %v462 = vmul.f32 %v461, %v294
        %v463 = vmul.f32 %v460, %v298
        %v464 = vpack.c.bf16 %v462, %v462
        %v465 = vpack.c.bf16 %v463, %v463
        %v468 = vunpack.c.l.b16 %v464
        %v469 = vunpack.c.l.b16 %v465
        %v470 = vpack.c.b16 %v469, %v468
        %472 = vst [vmem:[#allocation2 + $0x18] sm:$0xff] %v470
        %v473 = vld [vmem:[%s266] sm:$0xff]
        %v474 = vld [vmem:[%s266 + $0x8] sm:$0xff]
        %475 = vrot.lane.b32.xlu0 %v473, 15
        %v476 = vpop.permute.xlu0 %475
        %477 = vrot.lane.b32.xlu0 %v474, 15
        %v478 = vpop.permute.xlu0 %477
        %vm479 = vcmp.lt.s32.totalorder %v399, 15
        %v480 = vsel %vm479, %v476, %v478
        %v481 = vsel %vm479, %v478, %v476
        %v482 = vmul.f32 %v481, %v307
        %v483 = vmul.f32 %v480, %v311
        %v484 = vpack.c.bf16 %v482, %v482
        %v485 = vpack.c.bf16 %v483, %v483
        %v488 = vunpack.c.l.b16 %v484
        %v489 = vunpack.c.l.b16 %v485
        %v490 = vpack.c.b16 %v489, %v488
        %492 = vst [vmem:[#allocation2 + $0x20] sm:$0xff] %v490
        %v493 = vld [vmem:[%s414] sm:$0xff]
        %v494 = vld [vmem:[%s414 + $0x8] sm:$0xff]
        %495 = vrot.lane.b32.xlu0 %v493, 15
        %v496 = vpop.permute.xlu0 %495
        %497 = vrot.lane.b32.xlu0 %v494, 15
        %v498 = vpop.permute.xlu0 %497
        %v499 = vsel %vm479, %v496, %v498
        %v500 = vsel %vm479, %v498, %v496
        %v501 = vmul.f32 %v500, %v307
        %v502 = vmul.f32 %v499, %v311
        %v503 = vpack.c.bf16 %v501, %v501
        %v504 = vpack.c.bf16 %v502, %v502
        %v507 = vunpack.c.l.b16 %v503
        %v508 = vunpack.c.l.b16 %v504
        %v509 = vpack.c.b16 %v508, %v507
        %511 = vst [vmem:[#allocation2 + $0x28] sm:$0xff] %v509
        %v512 = vld [vmem:[%s266] sm:$0xff]
        %v513 = vld [vmem:[%s266 + $0x8] sm:$0xff]
        %514 = vrot.lane.b32.xlu0 %v512, 1
        %v515 = vpop.permute.xlu0 %514
        %516 = vrot.lane.b32.xlu0 %v513, 1
        %v517 = vpop.permute.xlu0 %516
        %vm518 = vcmp.lt.s32.totalorder %v399, 1
        %v519 = vsel %vm518, %v515, %v517
        %v520 = vsel %vm518, %v517, %v515
        %v521 = vmul.f32 %v520, %v320
        %v522 = vmul.f32 %v519, %v324
        %v523 = vpack.c.bf16 %v521, %v521
        %v524 = vpack.c.bf16 %v522, %v522
        %v527 = vunpack.c.l.b16 %v523
        %v528 = vunpack.c.l.b16 %v524
        %v529 = vpack.c.b16 %v528, %v527
        %531 = vst [vmem:[#allocation2 + $0x30] sm:$0xff] %v529
        %v532 = vld [vmem:[%s414] sm:$0xff]
        %v533 = vld [vmem:[%s414 + $0x8] sm:$0xff]
        %534 = vrot.lane.b32.xlu0 %v532, 1
        %v535 = vpop.permute.xlu0 %534
        %536 = vrot.lane.b32.xlu0 %v533, 1
        %v537 = vpop.permute.xlu0 %536
        %v538 = vsel %vm518, %v535, %v537
        %v539 = vsel %vm518, %v537, %v535
        %v540 = vmul.f32 %v539, %v320
        %v541 = vmul.f32 %v538, %v324
        %v542 = vpack.c.bf16 %v540, %v540
        %v543 = vpack.c.bf16 %v541, %v541
        %v546 = vunpack.c.l.b16 %v542
        %v547 = vunpack.c.l.b16 %v543
        %v548 = vpack.c.b16 %v547, %v546
        %550 = vst [vmem:[#allocation2 + $0x38] sm:$0xff] %v548
        %v551 = vld [vmem:[%s266] sm:$0xff]
        %v552 = vld [vmem:[%s266 + $0x8] sm:$0xff]
        %v553 = vmul.f32 %v551, %v333
        %v554 = vmul.f32 %v552, %v337
        %v555 = vpack.c.bf16 %v553, %v553
        %v556 = vpack.c.bf16 %v554, %v554
        %v559 = vunpack.c.l.b16 %v555
        %v560 = vunpack.c.l.b16 %v556
        %v561 = vpack.c.b16 %v560, %v559
        %563 = vst [vmem:[#allocation2 + $0x40] sm:$0xff] %v561
        %v564 = vld [vmem:[%s414] sm:$0xff]
        %v565 = vld [vmem:[%s414 + $0x8] sm:$0xff]
        %v566 = vmul.f32 %v564, %v333
        %v567 = vmul.f32 %v565, %v337
        %v568 = vpack.c.bf16 %v566, %v566
        %v569 = vpack.c.bf16 %v567, %v567
        %v572 = vunpack.c.l.b16 %v568
        %v573 = vunpack.c.l.b16 %v569
        %v574 = vpack.c.b16 %v573, %v572
        %576 = vst [vmem:[#allocation2 + $0x48] sm:$0xff] %v574
        %v577 = vld [vmem:[%s266] sm:$0xff]
        %v578 = vld [vmem:[%s266 + $0x8] sm:$0xff]
        %579 = vrot.lane.b32.xlu0 %v577, 127
        %v580 = vpop.permute.xlu0 %579
        %581 = vrot.lane.b32.xlu0 %v578, 127
        %v582 = vpop.permute.xlu0 %581
        %vm583 = vcmp.lt.s32.totalorder %v399, 127
        %v584 = vsel %vm583, %v580, %v582
        %v585 = vsel %vm583, %v582, %v580
        %v586 = vmul.f32 %v584, %v346
        %v587 = vmul.f32 %v585, %v350
        %v588 = vpack.c.bf16 %v586, %v586
        %v589 = vpack.c.bf16 %v587, %v587
        %v592 = vunpack.c.l.b16 %v588
        %v593 = vunpack.c.l.b16 %v589
        %v594 = vpack.c.b16 %v593, %v592
        %596 = vst [vmem:[#allocation2 + $0x50] sm:$0xff] %v594
        %v597 = vld [vmem:[%s414] sm:$0xff]
        %v598 = vld [vmem:[%s414 + $0x8] sm:$0xff]
        %599 = vrot.lane.b32.xlu0 %v597, 127
        %v600 = vpop.permute.xlu0 %599
        %601 = vrot.lane.b32.xlu0 %v598, 127
        %v602 = vpop.permute.xlu0 %601
        %v603 = vsel %vm583, %v600, %v602
        %v604 = vsel %vm583, %v602, %v600
        %v605 = vmul.f32 %v603, %v346
        %v606 = vmul.f32 %v604, %v350
        %v607 = vpack.c.bf16 %v605, %v605
        %v608 = vpack.c.bf16 %v606, %v606
        %v611 = vunpack.c.l.b16 %v607
        %v612 = vunpack.c.l.b16 %v608
        %v613 = vpack.c.b16 %v612, %v611
        %615 = vst [vmem:[#allocation2 + $0x58] sm:$0xff] %v613
        %v616 = vld [vmem:[%s266] sm:$0xff]
        %v617 = vld [vmem:[%s266 + $0x8] sm:$0xff]
        %618 = vrot.lane.b32.xlu0 %v616, 113
        %v619 = vpop.permute.xlu0 %618
        %620 = vrot.lane.b32.xlu0 %v617, 113
        %v621 = vpop.permute.xlu0 %620
        %vm622 = vcmp.lt.s32.totalorder %v399, 113
        %v623 = vsel %vm622, %v619, %v621
        %v624 = vsel %vm622, %v621, %v619
        %v625 = vmul.f32 %v623, %v359
        %v626 = vmul.f32 %v624, %v363
        %v627 = vpack.c.bf16 %v625, %v625
        %v628 = vpack.c.bf16 %v626, %v626
        %v631 = vunpack.c.l.b16 %v627
        %v632 = vunpack.c.l.b16 %v628
        %v633 = vpack.c.b16 %v632, %v631
        %635 = vst [vmem:[#allocation2 + $0x60] sm:$0xff] %v633
        %v636 = vld [vmem:[%s414] sm:$0xff]
        %v637 = vld [vmem:[%s414 + $0x8] sm:$0xff]
        %638 = vrot.lane.b32.xlu0 %v636, 113
        %v639 = vpop.permute.xlu0 %638
        %640 = vrot.lane.b32.xlu0 %v637, 113
        %v641 = vpop.permute.xlu0 %640
        %v642 = vsel %vm622, %v639, %v641
        %v643 = vsel %vm622, %v641, %v639
        %v644 = vmul.f32 %v642, %v359
        %v645 = vmul.f32 %v643, %v363
        %v646 = vpack.c.bf16 %v644, %v644
        %v647 = vpack.c.bf16 %v645, %v645
        %v650 = vunpack.c.l.b16 %v646
        %v651 = vunpack.c.l.b16 %v647
        %v652 = vpack.c.b16 %v651, %v650
        %654 = vst [vmem:[#allocation2 + $0x68] sm:$0xff] %v652
        %v655 = vld [vmem:[%s266] sm:$0xff]
        %v656 = vld [vmem:[%s266 + $0x8] sm:$0xff]
        %657 = vrot.lane.b32.xlu0 %v655, 112
        %v658 = vpop.permute.xlu0 %657
        %659 = vrot.lane.b32.xlu0 %v656, 112
        %v660 = vpop.permute.xlu0 %659
        %vm661 = vcmp.lt.s32.totalorder %v399, 112
        %v662 = vsel %vm661, %v658, %v660
        %v663 = vsel %vm661, %v660, %v658
        %v664 = vmul.f32 %v662, %v372
        %v665 = vmul.f32 %v663, %v376
        %v666 = vpack.c.bf16 %v664, %v664
        %v667 = vpack.c.bf16 %v665, %v665
        %v670 = vunpack.c.l.b16 %v666
        %v671 = vunpack.c.l.b16 %v667
        %v672 = vpack.c.b16 %v671, %v670
        %674 = vst [vmem:[#allocation2 + $0x70] sm:$0xff] %v672
        %v675 = vld [vmem:[%s414] sm:$0xff]
        %v676 = vld [vmem:[%s414 + $0x8] sm:$0xff]
        %677 = vrot.lane.b32.xlu0 %v675, 112
        %v678 = vpop.permute.xlu0 %677
        %679 = vrot.lane.b32.xlu0 %v676, 112
        %v680 = vpop.permute.xlu0 %679
        %v681 = vsel %vm661, %v678, %v680
        %v682 = vsel %vm661, %v680, %v678
        %v683 = vmul.f32 %v681, %v372
        %v684 = vmul.f32 %v682, %v376
        %v685 = vpack.c.bf16 %v683, %v683
        %v686 = vpack.c.bf16 %v684, %v684
        %v689 = vunpack.c.l.b16 %v685
        %v690 = vunpack.c.l.b16 %v686
        %v691 = vpack.c.b16 %v690, %v689
        %693 = vst [vmem:[#allocation2 + $0x78] sm:$0xff] %v691
        %v694 = vld [vmem:[%s266] sm:$0xff]
        %v695 = vld [vmem:[%s266 + $0x8] sm:$0xff]
        %696 = vrot.lane.b32.xlu0 %v694, 111
        %v697 = vpop.permute.xlu0 %696
        %698 = vrot.lane.b32.xlu0 %v695, 111
        %v699 = vpop.permute.xlu0 %698
        %vm700 = vcmp.lt.s32.totalorder %v399, 111
        %v701 = vsel %vm700, %v697, %v699
        %v702 = vsel %vm700, %v699, %v697
        %v703 = vmul.f32 %v701, %v385
        %v704 = vmul.f32 %v702, %v389
        %v705 = vpack.c.bf16 %v703, %v703
        %v706 = vpack.c.bf16 %v704, %v704
        %v709 = vunpack.c.l.b16 %v705
        %v710 = vunpack.c.l.b16 %v706
        %v711 = vpack.c.b16 %v710, %v709
        %713 = vst [vmem:[#allocation2 + $0x80] sm:$0xff] %v711
        %v714 = vld [vmem:[%s414] sm:$0xff]
        %v715 = vld [vmem:[%s414 + $0x8] sm:$0xff]
        %716 = vrot.lane.b32.xlu0 %v714, 111
        %v717 = vpop.permute.xlu0 %716
        %718 = vrot.lane.b32.xlu0 %v715, 111
        %v719 = vpop.permute.xlu0 %718
        %v720 = vsel %vm700, %v717, %v719
        %v721 = vsel %vm700, %v719, %v717
        %v722 = vmul.f32 %v720, %v385
        %v723 = vmul.f32 %v721, %v389
        %v724 = vpack.c.bf16 %v722, %v722
        %v725 = vpack.c.bf16 %v723, %v723
        %v728 = vunpack.c.l.b16 %v724
        %v729 = vunpack.c.l.b16 %v725
        %v730 = vpack.c.b16 %v729, %v728
        %732 = vst [vmem:[#allocation2 + $0x88] sm:$0xff] %v730
        %v733 = vld [vmem:[%s2] sm:$0xf]
        %v734 = vld [vmem:[#allocation2] sm:$0xff]
        %v735 = vld [vmem:[#allocation2 + $0x8] sm:$0xff]
        %v736 = vld [vmem:[#allocation2 + $0x10] sm:$0xff]
        %v737 = vld [vmem:[#allocation2 + $0x18] sm:$0xff]
        %v738 = vld [vmem:[#allocation2 + $0x20] sm:$0xff]
        %v739 = vld [vmem:[#allocation2 + $0x28] sm:$0xff]
        %v740 = vld [vmem:[#allocation2 + $0x30] sm:$0xff]
        %v741 = vld [vmem:[#allocation2 + $0x38] sm:$0xff]
        %v742 = vld [vmem:[#allocation2 + $0x40] sm:$0xff]
        %v743 = vld [vmem:[#allocation2 + $0x48] sm:$0xff]
        %v744 = vld [vmem:[#allocation2 + $0x50] sm:$0xff]
        %v745 = vld [vmem:[#allocation2 + $0x58] sm:$0xff]
        %v746 = vld [vmem:[#allocation2 + $0x60] sm:$0xff]
        %v747 = vld [vmem:[#allocation2 + $0x68] sm:$0xff]
        %v748 = vld [vmem:[#allocation2 + $0x70] sm:$0xff]
        %v749 = vld [vmem:[#allocation2 + $0x78] sm:$0xff]
        %v750 = vld [vmem:[#allocation2 + $0x80] sm:$0xff]
        %v751 = vld [vmem:[#allocation2 + $0x88] sm:$0xff]
        %v752 = vld [vmem:[%s3] sm:$0xff]
        %754 = vset.pattern.permute.xlu0 0
        %755 = vperm.xlu0 %754, %v752
        %v756 = vpop.permute.xlu0 %755
        %v776 = vunpack.c.l.b16 %v734
        %v777 = vunpack.c.h.b16 %v734
        %v778 = vunpack.c.l.b16 %v735
        %v779 = vunpack.c.h.b16 %v735
        %v780 = vunpack.c.l.b16 %v736
        %v781 = vunpack.c.h.b16 %v736
        %v782 = vunpack.c.l.b16 %v737
        %v783 = vunpack.c.h.b16 %v737
        %v784 = vunpack.c.l.b16 %v738
        %v785 = vunpack.c.h.b16 %v738
        %v786 = vunpack.c.l.b16 %v739
        %v787 = vunpack.c.h.b16 %v739
        %v788 = vunpack.c.l.b16 %v740
        %v789 = vunpack.c.h.b16 %v740
        %v790 = vunpack.c.l.b16 %v741
        %v791 = vunpack.c.h.b16 %v741
        %v792 = vunpack.c.l.b16 %v742
        %v793 = vunpack.c.h.b16 %v742
        %v794 = vunpack.c.l.b16 %v743
        %v795 = vunpack.c.h.b16 %v743
        %v796 = vunpack.c.l.b16 %v744
        %v797 = vunpack.c.h.b16 %v744
        %v798 = vunpack.c.l.b16 %v745
        %v799 = vunpack.c.h.b16 %v745
        %v800 = vunpack.c.l.b16 %v746
        %v801 = vunpack.c.h.b16 %v746
        %v802 = vunpack.c.l.b16 %v747
        %v803 = vunpack.c.h.b16 %v747
        %v804 = vunpack.c.l.b16 %v748
        %v805 = vunpack.c.h.b16 %v748
        %v806 = vunpack.c.l.b16 %v749
        %v807 = vunpack.c.h.b16 %v749
        %v808 = vunpack.c.l.b16 %v750
        %v809 = vunpack.c.h.b16 %v750
        %v810 = vunpack.c.l.b16 %v751
        %v811 = vunpack.c.h.b16 %v751
        %v812 = vpack.c.b16 %v780, %v776
        %v813 = vpack.c.b16 %v781, %v777
        %v814 = vpack.c.b16 %v782, %v778
        %v815 = vpack.c.b16 %v783, %v779
        %v816 = vpack.c.b16 %v788, %v784
        %v817 = vpack.c.b16 %v789, %v785
        %v818 = vpack.c.b16 %v790, %v786
        %v819 = vpack.c.b16 %v791, %v787
        %v820 = vpack.c.b16 %v796, %v792
        %v821 = vpack.c.b16 %v797, %v793
        %v822 = vpack.c.b16 %v798, %v794
        %v823 = vpack.c.b16 %v799, %v795
        %v824 = vpack.c.b16 %v804, %v800
        %v825 = vpack.c.b16 %v805, %v801
        %v826 = vpack.c.b16 %v806, %v802
        %v827 = vpack.c.b16 %v807, %v803
        %v828 = vpack.c.b16 %v808, %v808
        %v829 = vpack.c.b16 %v809, %v809
        %v830 = vpack.c.b16 %v810, %v810
        %v831 = vpack.c.b16 %v811, %v811
        %vm848 = vcmask 588800
        %v850 = vsel %vm848, %v733, 0
        %vm852 = vcmask 1043456
        %v854 = vsel %vm852, %v828, 0
        %v857 = vsel %vm852, %v829, 0
        %v860 = vsel %vm852, %v830, 0
        %v863 = vsel %vm852, %v831, 0
        %865 = vmatprep.subr.bf16.mxu0 %v813
        %866 = vmatpush1.bf16.msra.mxu0 %v812
        %867 = vmatprep.subr.bf16.mxu0 %v817
        %868 = vmatpush1.bf16.msra.mxu0 %v816
        %869 = vmatprep.subr.bf16.mxu0 %v821
        %870 = vmatpush1.bf16.msra.mxu0 %v820
        %871 = vmatprep.subr.bf16.mxu0 %v825
        %872 = vmatpush1.bf16.msra.mxu0 %v824
        %873 = vmatprep.subr.bf16.mxu0 %v857
        %874 = vmatpush1.bf16.msra.mxu0 %v854
        %875 = vmatprep.subr.bf16.mxu0 0
        %876 = vmatpush1.bf16.msra.mxu0 0
        %877 = vmatprep.subr.bf16.mxu0 0
        %878 = vmatpush1.bf16.msra.mxu0 0
        %879 = vmatprep.subr.bf16.mxu0 0
        %880 = vmatpush1.bf16.msra.mxu0 0
        %881 = vmatprep.subr.bf16.mxu0 0
        %882 = vmatpush1.bf16.msra.mxu0 0
        %883 = vmatprep.subr.bf16.mxu0 0
        %884 = vmatpush1.bf16.msra.mxu0 0
        %885 = vmatprep.subr.bf16.mxu0 0
        %886 = vmatpush1.bf16.msra.mxu0 0
        %887 = vmatprep.subr.bf16.mxu0 0
        %888 = vmatpush1.bf16.msra.mxu0 0
        %889 = vmatprep.subr.bf16.mxu0 0
        %890 = vmatpush1.bf16.msra.mxu0 0
        %891 = vmatprep.subr.bf16.mxu0 0
        %892 = vmatpush1.bf16.msra.mxu0 0
        %893 = vmatprep.subr.bf16.mxu0 0
        %894 = vmatpush1.bf16.msra.mxu0 0
        %895 = vmatprep.subr.bf16.mxu0 0
        %896 = vmatpush1.bf16.msra.mxu0 0
        %897 = vmatprep.mubr.bf16.mxu0 0
        %898 = vmatmul.mubr.bf16.gmra.mrb[0].mxu0 %v850
        %v899 = vpop.f32.mrb[0].mxu0
        %v900 = vadd.f32 %v756, %v899
        %v901 = vpop.f32.mrb[0].mxu0
        %v902 = vadd.f32 %v756, %v901
        %v903 = vpop.f32.mrb[0].mxu0
        %v904 = vpop.f32.mrb[0].mxu0
        %905 = vdwg.mxu0
        %906 = vmatprep.subr.bf16.mxu0 %v815
        %907 = vmatpush1.bf16.msra.mxu0 %v814
        %908 = vmatprep.subr.bf16.mxu0 %v819
        %909 = vmatpush1.bf16.msra.mxu0 %v818
        %910 = vmatprep.subr.bf16.mxu0 %v823
        %911 = vmatpush1.bf16.msra.mxu0 %v822
        %912 = vmatprep.subr.bf16.mxu0 %v827
        %913 = vmatpush1.bf16.msra.mxu0 %v826
        %914 = vmatprep.subr.bf16.mxu0 %v863
        %915 = vmatpush1.bf16.msra.mxu0 %v860
        %916 = vmatprep.subr.bf16.mxu0 0
        %917 = vmatpush1.bf16.msra.mxu0 0
        %918 = vmatprep.subr.bf16.mxu0 0
        %919 = vmatpush1.bf16.msra.mxu0 0
        %920 = vmatprep.subr.bf16.mxu0 0
        %921 = vmatpush1.bf16.msra.mxu0 0
        %922 = vmatprep.subr.bf16.mxu0 0
        %923 = vmatpush1.bf16.msra.mxu0 0
        %924 = vmatprep.subr.bf16.mxu0 0
        %925 = vmatpush1.bf16.msra.mxu0 0
        %926 = vmatprep.subr.bf16.mxu0 0
        %927 = vmatpush1.bf16.msra.mxu0 0
        %928 = vmatprep.subr.bf16.mxu0 0
        %929 = vmatpush1.bf16.msra.mxu0 0
        %930 = vmatprep.subr.bf16.mxu0 0
        %931 = vmatpush1.bf16.msra.mxu0 0
        %932 = vmatprep.subr.bf16.mxu0 0
        %933 = vmatpush1.bf16.msra.mxu0 0
        %934 = vmatprep.subr.bf16.mxu0 0
        %935 = vmatpush1.bf16.msra.mxu0 0
        %936 = vmatprep.subr.bf16.mxu0 0
        %937 = vmatpush1.bf16.msra.mxu0 0
        %938 = vmatprep.mubr.bf16.mxu0 0
        %939 = vmatmul.mubr.bf16.gmra.mrb[0].mxu0 %v850
        %v940 = vpop.f32.mrb[0].mxu0
        %v941 = vadd.f32 %v756, %v940
        %v942 = vpop.f32.mrb[0].mxu0
        %v943 = vadd.f32 %v756, %v942
        %v944 = vpop.f32.mrb[0].mxu0
        %v945 = vpop.f32.mrb[0].mxu0
        %946 = vdwg.mxu0
        %v947 = vmax.f32 %v900, 0.0
        %v948 = vmax.f32 %v902, 0.0
        %v949 = vmax.f32 %v941, 0.0
        %v950 = vmax.f32 %v943, 0.0
        %951 = vrot.lane.b32.xlu0 %v947, 17
        %v952 = vpop.permute.xlu0 %951
        %953 = vrot.lane.b32.xlu0 %v948, 17
        %v954 = vpop.permute.xlu0 %953
        %v955 = vsel %vm400, %v952, %v954
        %v956 = vsel %vm400, %v954, %v952
        %v957 = vmul.f32 %v956, %v281
        %v958 = vmul.f32 %v955, %v285
        %v959 = vpack.c.bf16 %v957, %v957
        %v960 = vpack.c.bf16 %v958, %v958
        %v963 = vunpack.c.l.b16 %v959
        %v964 = vunpack.c.l.b16 %v960
        %v965 = vpack.c.b16 %v964, %v963
        %967 = vst [vmem:[#allocation3] sm:$0xff] %v965
        %968 = vrot.lane.b32.xlu0 %v949, 17
        %v969 = vpop.permute.xlu0 %968
        %970 = vrot.lane.b32.xlu0 %v950, 17
        %v971 = vpop.permute.xlu0 %970
        %v972 = vsel %vm400, %v969, %v971
        %v973 = vsel %vm400, %v971, %v969
        %v974 = vmul.f32 %v973, %v281
        %v975 = vmul.f32 %v972, %v285
        %v976 = vpack.c.bf16 %v974, %v974
        %v977 = vpack.c.bf16 %v975, %v975
        %v980 = vunpack.c.l.b16 %v976
        %v981 = vunpack.c.l.b16 %v977
        %v982 = vpack.c.b16 %v981, %v980
        %984 = vst [vmem:[#allocation3 + $0x8] sm:$0xff] %v982
        %985 = vrot.lane.b32.xlu0 %v947, 16
        %v986 = vpop.permute.xlu0 %985
        %987 = vrot.lane.b32.xlu0 %v948, 16
        %v988 = vpop.permute.xlu0 %987
        %v989 = vsel %vm440, %v986, %v988
        %v990 = vsel %vm440, %v988, %v986
        %v991 = vmul.f32 %v990, %v294
        %v992 = vmul.f32 %v989, %v298
        %v993 = vpack.c.bf16 %v991, %v991
        %v994 = vpack.c.bf16 %v992, %v992
        %v997 = vunpack.c.l.b16 %v993
        %v998 = vunpack.c.l.b16 %v994
        %v999 = vpack.c.b16 %v998, %v997
        %1001 = vst [vmem:[#allocation3 + $0x10] sm:$0xff] %v999
        %1002 = vrot.lane.b32.xlu0 %v949, 16
        %v1003 = vpop.permute.xlu0 %1002
        %1004 = vrot.lane.b32.xlu0 %v950, 16
        %v1005 = vpop.permute.xlu0 %1004
        %v1006 = vsel %vm440, %v1003, %v1005
        %v1007 = vsel %vm440, %v1005, %v1003
        %v1008 = vmul.f32 %v1007, %v294
        %v1009 = vmul.f32 %v1006, %v298
        %v1010 = vpack.c.bf16 %v1008, %v1008
        %v1011 = vpack.c.bf16 %v1009, %v1009
        %v1014 = vunpack.c.l.b16 %v1010
        %v1015 = vunpack.c.l.b16 %v1011
        %v1016 = vpack.c.b16 %v1015, %v1014
        %1018 = vst [vmem:[#allocation3 + $0x18] sm:$0xff] %v1016
        %1019 = vrot.lane.b32.xlu0 %v947, 15
        %v1020 = vpop.permute.xlu0 %1019
        %1021 = vrot.lane.b32.xlu0 %v948, 15
        %v1022 = vpop.permute.xlu0 %1021
        %v1023 = vsel %vm479, %v1020, %v1022
        %v1024 = vsel %vm479, %v1022, %v1020
        %v1025 = vmul.f32 %v1024, %v307
        %v1026 = vmul.f32 %v1023, %v311
        %v1027 = vpack.c.bf16 %v1025, %v1025
        %v1028 = vpack.c.bf16 %v1026, %v1026
        %v1031 = vunpack.c.l.b16 %v1027
        %v1032 = vunpack.c.l.b16 %v1028
        %v1033 = vpack.c.b16 %v1032, %v1031
        %1035 = vst [vmem:[#allocation3 + $0x20] sm:$0xff] %v1033
        %1036 = vrot.lane.b32.xlu0 %v949, 15
        %v1037 = vpop.permute.xlu0 %1036
        %1038 = vrot.lane.b32.xlu0 %v950, 15
        %v1039 = vpop.permute.xlu0 %1038
        %v1040 = vsel %vm479, %v1037, %v1039
        %v1041 = vsel %vm479, %v1039, %v1037
        %v1042 = vmul.f32 %v1041, %v307
        %v1043 = vmul.f32 %v1040, %v311
        %v1044 = vpack.c.bf16 %v1042, %v1042
        %v1045 = vpack.c.bf16 %v1043, %v1043
        %v1048 = vunpack.c.l.b16 %v1044
        %v1049 = vunpack.c.l.b16 %v1045
        %v1050 = vpack.c.b16 %v1049, %v1048
        %1052 = vst [vmem:[#allocation3 + $0x28] sm:$0xff] %v1050
        %1053 = vrot.lane.b32.xlu0 %v947, 1
        %v1054 = vpop.permute.xlu0 %1053
        %1055 = vrot.lane.b32.xlu0 %v948, 1
        %v1056 = vpop.permute.xlu0 %1055
        %v1057 = vsel %vm518, %v1054, %v1056
        %v1058 = vsel %vm518, %v1056, %v1054
        %v1059 = vmul.f32 %v1058, %v320
        %v1060 = vmul.f32 %v1057, %v324
        %v1061 = vpack.c.bf16 %v1059, %v1059
        %v1062 = vpack.c.bf16 %v1060, %v1060
        %v1065 = vunpack.c.l.b16 %v1061
        %v1066 = vunpack.c.l.b16 %v1062
        %v1067 = vpack.c.b16 %v1066, %v1065
        %1069 = vst [vmem:[#allocation3 + $0x30] sm:$0xff] %v1067
        %1070 = vrot.lane.b32.xlu0 %v949, 1
        %v1071 = vpop.permute.xlu0 %1070
        %1072 = vrot.lane.b32.xlu0 %v950, 1
        %v1073 = vpop.permute.xlu0 %1072
        %v1074 = vsel %vm518, %v1071, %v1073
        %v1075 = vsel %vm518, %v1073, %v1071
        %v1076 = vmul.f32 %v1075, %v320
        %v1077 = vmul.f32 %v1074, %v324
        %v1078 = vpack.c.bf16 %v1076, %v1076
        %v1079 = vpack.c.bf16 %v1077, %v1077
        %v1082 = vunpack.c.l.b16 %v1078
        %v1083 = vunpack.c.l.b16 %v1079
        %v1084 = vpack.c.b16 %v1083, %v1082
        %1086 = vst [vmem:[#allocation3 + $0x38] sm:$0xff] %v1084
        %v1087 = vmul.f32 %v947, %v333
        %v1088 = vmul.f32 %v948, %v337
        %v1089 = vpack.c.bf16 %v1087, %v1087
        %v1090 = vpack.c.bf16 %v1088, %v1088
        %v1093 = vunpack.c.l.b16 %v1089
        %v1094 = vunpack.c.l.b16 %v1090
        %v1095 = vpack.c.b16 %v1094, %v1093
        %1097 = vst [vmem:[#allocation3 + $0x40] sm:$0xff] %v1095
        %v1098 = vmul.f32 %v949, %v333
        %v1099 = vmul.f32 %v950, %v337
        %v1100 = vpack.c.bf16 %v1098, %v1098
        %v1101 = vpack.c.bf16 %v1099, %v1099
        %v1104 = vunpack.c.l.b16 %v1100
        %v1105 = vunpack.c.l.b16 %v1101
        %v1106 = vpack.c.b16 %v1105, %v1104
        %1108 = vst [vmem:[#allocation3 + $0x48] sm:$0xff] %v1106
        %1109 = vrot.lane.b32.xlu0 %v947, 127
        %v1110 = vpop.permute.xlu0 %1109
        %1111 = vrot.lane.b32.xlu0 %v948, 127
        %v1112 = vpop.permute.xlu0 %1111
        %v1113 = vsel %vm583, %v1110, %v1112
        %v1114 = vsel %vm583, %v1112, %v1110
        %v1115 = vmul.f32 %v1113, %v346
        %v1116 = vmul.f32 %v1114, %v350
        %v1117 = vpack.c.bf16 %v1115, %v1115
        %v1118 = vpack.c.bf16 %v1116, %v1116
        %v1121 = vunpack.c.l.b16 %v1117
        %v1122 = vunpack.c.l.b16 %v1118
        %v1123 = vpack.c.b16 %v1122, %v1121
        %1125 = vst [vmem:[#allocation3 + $0x50] sm:$0xff] %v1123
        %1126 = vrot.lane.b32.xlu0 %v949, 127
        %v1127 = vpop.permute.xlu0 %1126
        %1128 = vrot.lane.b32.xlu0 %v950, 127
        %v1129 = vpop.permute.xlu0 %1128
        %v1130 = vsel %vm583, %v1127, %v1129
        %v1131 = vsel %vm583, %v1129, %v1127
        %v1132 = vmul.f32 %v1130, %v346
        %v1133 = vmul.f32 %v1131, %v350
        %v1134 = vpack.c.bf16 %v1132, %v1132
        %v1135 = vpack.c.bf16 %v1133, %v1133
        %v1138 = vunpack.c.l.b16 %v1134
        %v1139 = vunpack.c.l.b16 %v1135
        %v1140 = vpack.c.b16 %v1139, %v1138
        %1142 = vst [vmem:[#allocation3 + $0x58] sm:$0xff] %v1140
        %1143 = vrot.lane.b32.xlu0 %v947, 113
        %v1144 = vpop.permute.xlu0 %1143
        %1145 = vrot.lane.b32.xlu0 %v948, 113
        %v1146 = vpop.permute.xlu0 %1145
        %v1147 = vsel %vm622, %v1144, %v1146
        %v1148 = vsel %vm622, %v1146, %v1144
        %v1149 = vmul.f32 %v1147, %v359
        %v1150 = vmul.f32 %v1148, %v363
        %v1151 = vpack.c.bf16 %v1149, %v1149
        %v1152 = vpack.c.bf16 %v1150, %v1150
        %v1155 = vunpack.c.l.b16 %v1151
        %v1156 = vunpack.c.l.b16 %v1152
        %v1157 = vpack.c.b16 %v1156, %v1155
        %1159 = vst [vmem:[#allocation3 + $0x60] sm:$0xff] %v1157
        %1160 = vrot.lane.b32.xlu0 %v949, 113
        %v1161 = vpop.permute.xlu0 %1160
        %1162 = vrot.lane.b32.xlu0 %v950, 113
        %v1163 = vpop.permute.xlu0 %1162
        %v1164 = vsel %vm622, %v1161, %v1163
        %v1165 = vsel %vm622, %v1163, %v1161
        %v1166 = vmul.f32 %v1164, %v359
        %v1167 = vmul.f32 %v1165, %v363
        %v1168 = vpack.c.bf16 %v1166, %v1166
        %v1169 = vpack.c.bf16 %v1167, %v1167
        %v1172 = vunpack.c.l.b16 %v1168
        %v1173 = vunpack.c.l.b16 %v1169
        %v1174 = vpack.c.b16 %v1173, %v1172
        %1176 = vst [vmem:[#allocation3 + $0x68] sm:$0xff] %v1174
        %1177 = vrot.lane.b32.xlu0 %v947, 112
        %v1178 = vpop.permute.xlu0 %1177
        %1179 = vrot.lane.b32.xlu0 %v948, 112
        %v1180 = vpop.permute.xlu0 %1179
        %v1181 = vsel %vm661, %v1178, %v1180
        %v1182 = vsel %vm661, %v1180, %v1178
        %v1183 = vmul.f32 %v1181, %v372
        %v1184 = vmul.f32 %v1182, %v376
        %v1185 = vpack.c.bf16 %v1183, %v1183
        %v1186 = vpack.c.bf16 %v1184, %v1184
        %v1189 = vunpack.c.l.b16 %v1185
        %v1190 = vunpack.c.l.b16 %v1186
        %v1191 = vpack.c.b16 %v1190, %v1189
        %1193 = vst [vmem:[#allocation3 + $0x70] sm:$0xff] %v1191
        %1194 = vrot.lane.b32.xlu0 %v949, 112
        %v1195 = vpop.permute.xlu0 %1194
        %1196 = vrot.lane.b32.xlu0 %v950, 112
        %v1197 = vpop.permute.xlu0 %1196
        %v1198 = vsel %vm661, %v1195, %v1197
        %v1199 = vsel %vm661, %v1197, %v1195
        %v1200 = vmul.f32 %v1198, %v372
        %v1201 = vmul.f32 %v1199, %v376
        %v1202 = vpack.c.bf16 %v1200, %v1200
        %v1203 = vpack.c.bf16 %v1201, %v1201
        %v1206 = vunpack.c.l.b16 %v1202
        %v1207 = vunpack.c.l.b16 %v1203
        %v1208 = vpack.c.b16 %v1207, %v1206
        %1210 = vst [vmem:[#allocation3 + $0x78] sm:$0xff] %v1208
        %1211 = vrot.lane.b32.xlu0 %v947, 111
        %v1212 = vpop.permute.xlu0 %1211
        %1213 = vrot.lane.b32.xlu0 %v948, 111
        %v1214 = vpop.permute.xlu0 %1213
        %v1215 = vsel %vm700, %v1212, %v1214
        %v1216 = vsel %vm700, %v1214, %v1212
        %v1217 = vmul.f32 %v1215, %v385
        %v1218 = vmul.f32 %v1216, %v389
        %v1219 = vpack.c.bf16 %v1217, %v1217
        %v1220 = vpack.c.bf16 %v1218, %v1218
        %v1223 = vunpack.c.l.b16 %v1219
        %v1224 = vunpack.c.l.b16 %v1220
        %v1225 = vpack.c.b16 %v1224, %v1223
        %1227 = vst [vmem:[#allocation3 + $0x80] sm:$0xff] %v1225
        %1228 = vrot.lane.b32.xlu0 %v949, 111
        %v1229 = vpop.permute.xlu0 %1228
        %1230 = vrot.lane.b32.xlu0 %v950, 111
        %v1231 = vpop.permute.xlu0 %1230
        %v1232 = vsel %vm700, %v1229, %v1231
        %v1233 = vsel %vm700, %v1231, %v1229
        %v1234 = vmul.f32 %v1232, %v385
        %v1235 = vmul.f32 %v1233, %v389
        %v1236 = vpack.c.bf16 %v1234, %v1234
        %v1237 = vpack.c.bf16 %v1235, %v1235
        %v1240 = vunpack.c.l.b16 %v1236
        %v1241 = vunpack.c.l.b16 %v1237
        %v1242 = vpack.c.b16 %v1241, %v1240
        %1244 = vst [vmem:[#allocation3 + $0x88] sm:$0xff] %v1242
        %v1245 = vld [vmem:[%s4] sm:$0xf]
        %v1246 = vld [vmem:[%s4 + $0x4] sm:$0xf]
        %v1247 = vld [vmem:[#allocation3] sm:$0xff]
        %v1248 = vld [vmem:[#allocation3 + $0x8] sm:$0xff]
        %v1249 = vld [vmem:[#allocation3 + $0x10] sm:$0xff]
        %v1250 = vld [vmem:[#allocation3 + $0x18] sm:$0xff]
        %v1251 = vld [vmem:[#allocation3 + $0x20] sm:$0xff]
        %v1252 = vld [vmem:[#allocation3 + $0x28] sm:$0xff]
        %v1253 = vld [vmem:[#allocation3 + $0x30] sm:$0xff]
        %v1254 = vld [vmem:[#allocation3 + $0x38] sm:$0xff]
        %v1255 = vld [vmem:[#allocation3 + $0x40] sm:$0xff]
        %v1256 = vld [vmem:[#allocation3 + $0x48] sm:$0xff]
        %v1257 = vld [vmem:[#allocation3 + $0x50] sm:$0xff]
        %v1258 = vld [vmem:[#allocation3 + $0x58] sm:$0xff]
        %v1259 = vld [vmem:[#allocation3 + $0x60] sm:$0xff]
        %v1260 = vld [vmem:[#allocation3 + $0x68] sm:$0xff]
        %v1261 = vld [vmem:[#allocation3 + $0x70] sm:$0xff]
        %v1262 = vld [vmem:[#allocation3 + $0x78] sm:$0xff]
        %v1263 = vld [vmem:[#allocation3 + $0x80] sm:$0xff]
        %v1264 = vld [vmem:[#allocation3 + $0x88] sm:$0xff]
        %v1265 = vld [vmem:[%s5] sm:$0xff]
        %v1266 = vld [vmem:[%s5 + $0x8] sm:$0xff]
        %1268 = vset.pattern.permute.xlu0 0
        %1269 = vperm.xlu0 %1268, %v1265
        %v1270 = vpop.permute.xlu0 %1269
        %1273 = vset.pattern.permute.xlu0 0
        %1274 = vperm.xlu0 %1273, %v1266
        %v1275 = vpop.permute.xlu0 %1274
        %v1279 = vunpack.c.l.b16 %v1245
        %v1280 = vunpack.c.l.b16 %v1246
        %v1281 = vpack.c.b16 %v1280, %v1279
        %v1300 = vunpack.c.l.b16 %v1247
        %v1301 = vunpack.c.h.b16 %v1247
        %v1302 = vunpack.c.l.b16 %v1248
        %v1303 = vunpack.c.h.b16 %v1248
        %v1304 = vunpack.c.l.b16 %v1249
        %v1305 = vunpack.c.h.b16 %v1249
        %v1306 = vunpack.c.l.b16 %v1250
        %v1307 = vunpack.c.h.b16 %v1250
        %v1308 = vunpack.c.l.b16 %v1251
        %v1309 = vunpack.c.h.b16 %v1251
        %v1310 = vunpack.c.l.b16 %v1252
        %v1311 = vunpack.c.h.b16 %v1252
        %v1312 = vunpack.c.l.b16 %v1253
        %v1313 = vunpack.c.h.b16 %v1253
        %v1314 = vunpack.c.l.b16 %v1254
        %v1315 = vunpack.c.h.b16 %v1254
        %v1316 = vunpack.c.l.b16 %v1255
        %v1317 = vunpack.c.h.b16 %v1255
        %v1318 = vunpack.c.l.b16 %v1256
        %v1319 = vunpack.c.h.b16 %v1256
        %v1320 = vunpack.c.l.b16 %v1257
        %v1321 = vunpack.c.h.b16 %v1257
        %v1322 = vunpack.c.l.b16 %v1258
        %v1323 = vunpack.c.h.b16 %v1258
        %v1324 = vunpack.c.l.b16 %v1259
        %v1325 = vunpack.c.h.b16 %v1259
        %v1326 = vunpack.c.l.b16 %v1260
        %v1327 = vunpack.c.h.b16 %v1260
        %v1328 = vunpack.c.l.b16 %v1261
        %v1329 = vunpack.c.h.b16 %v1261
        %v1330 = vunpack.c.l.b16 %v1262
        %v1331 = vunpack.c.h.b16 %v1262
        %v1332 = vunpack.c.l.b16 %v1263
        %v1333 = vunpack.c.h.b16 %v1263
        %v1334 = vunpack.c.l.b16 %v1264
        %v1335 = vunpack.c.h.b16 %v1264
        %v1336 = vpack.c.b16 %v1304, %v1300
        %v1337 = vpack.c.b16 %v1305, %v1301
        %v1338 = vpack.c.b16 %v1306, %v1302
        %v1339 = vpack.c.b16 %v1307, %v1303
        %v1340 = vpack.c.b16 %v1312, %v1308
        %v1341 = vpack.c.b16 %v1313, %v1309
        %v1342 = vpack.c.b16 %v1314, %v1310
        %v1343 = vpack.c.b16 %v1315, %v1311
        %v1344 = vpack.c.b16 %v1320, %v1316
        %v1345 = vpack.c.b16 %v1321, %v1317
        %v1346 = vpack.c.b16 %v1322, %v1318
        %v1347 = vpack.c.b16 %v1323, %v1319
        %v1348 = vpack.c.b16 %v1328, %v1324
        %v1349 = vpack.c.b16 %v1329, %v1325
        %v1350 = vpack.c.b16 %v1330, %v1326
        %v1351 = vpack.c.b16 %v1331, %v1327
        %v1352 = vpack.c.b16 %v1332, %v1332
        %v1353 = vpack.c.b16 %v1333, %v1333
        %v1354 = vpack.c.b16 %v1334, %v1334
        %v1355 = vpack.c.b16 %v1335, %v1335
        %v1373 = vsel %vm848, %v1281, 0
        %v1376 = vsel %vm852, %v1352, 0
        %v1379 = vsel %vm852, %v1353, 0
        %v1382 = vsel %vm852, %v1354, 0
        %v1385 = vsel %vm852, %v1355, 0
        %1387 = vmatprep.subr.bf16.mxu0 %v1337
        %1388 = vmatpush1.bf16.msra.mxu0 %v1336
        %1389 = vmatprep.subr.bf16.mxu0 %v1341
        %1390 = vmatpush1.bf16.msra.mxu0 %v1340
        %1391 = vmatprep.subr.bf16.mxu0 %v1345
        %1392 = vmatpush1.bf16.msra.mxu0 %v1344
        %1393 = vmatprep.subr.bf16.mxu0 %v1349
        %1394 = vmatpush1.bf16.msra.mxu0 %v1348
        %1395 = vmatprep.subr.bf16.mxu0 %v1379
        %1396 = vmatpush1.bf16.msra.mxu0 %v1376
        %1397 = vmatprep.subr.bf16.mxu0 0
        %1398 = vmatpush1.bf16.msra.mxu0 0
        %1399 = vmatprep.subr.bf16.mxu0 0
        %1400 = vmatpush1.bf16.msra.mxu0 0
        %1401 = vmatprep.subr.bf16.mxu0 0
        %1402 = vmatpush1.bf16.msra.mxu0 0
        %1403 = vmatprep.subr.bf16.mxu0 0
        %1404 = vmatpush1.bf16.msra.mxu0 0
        %1405 = vmatprep.subr.bf16.mxu0 0
        %1406 = vmatpush1.bf16.msra.mxu0 0
        %1407 = vmatprep.subr.bf16.mxu0 0
        %1408 = vmatpush1.bf16.msra.mxu0 0
        %1409 = vmatprep.subr.bf16.mxu0 0
        %1410 = vmatpush1.bf16.msra.mxu0 0
        %1411 = vmatprep.subr.bf16.mxu0 0
        %1412 = vmatpush1.bf16.msra.mxu0 0
        %1413 = vmatprep.subr.bf16.mxu0 0
        %1414 = vmatpush1.bf16.msra.mxu0 0
        %1415 = vmatprep.subr.bf16.mxu0 0
        %1416 = vmatpush1.bf16.msra.mxu0 0
        %1417 = vmatprep.subr.bf16.mxu0 0
        %1418 = vmatpush1.bf16.msra.mxu0 0
        %1419 = vmatprep.mubr.bf16.mxu0 0
        %1420 = vmatmul.mubr.bf16.gmra.mrb[0].mxu0 %v1373
        %v1421 = vpop.f32.mrb[0].mxu0
        %v1422 = vadd.f32 %v1270, %v1421
        %v1423 = vpop.f32.mrb[0].mxu0
        %v1424 = vadd.f32 %v1270, %v1423
        %v1425 = vpop.f32.mrb[0].mxu0
        %v1426 = vadd.f32 %v1275, %v1425
        %v1427 = vpop.f32.mrb[0].mxu0
        %v1428 = vadd.f32 %v1275, %v1427
        %1429 = vdwg.mxu0
        %1430 = vmatprep.subr.bf16.mxu0 %v1339
        %1431 = vmatpush1.bf16.msra.mxu0 %v1338
        %1432 = vmatprep.subr.bf16.mxu0 %v1343
        %1433 = vmatpush1.bf16.msra.mxu0 %v1342
        %1434 = vmatprep.subr.bf16.mxu0 %v1347
        %1435 = vmatpush1.bf16.msra.mxu0 %v1346
        %1436 = vmatprep.subr.bf16.mxu0 %v1351
        %1437 = vmatpush1.bf16.msra.mxu0 %v1350
        %1438 = vmatprep.subr.bf16.mxu0 %v1385
        %1439 = vmatpush1.bf16.msra.mxu0 %v1382
        %1440 = vmatprep.subr.bf16.mxu0 0
        %1441 = vmatpush1.bf16.msra.mxu0 0
        %1442 = vmatprep.subr.bf16.mxu0 0
        %1443 = vmatpush1.bf16.msra.mxu0 0
        %1444 = vmatprep.subr.bf16.mxu0 0
        %1445 = vmatpush1.bf16.msra.mxu0 0
        %1446 = vmatprep.subr.bf16.mxu0 0
        %1447 = vmatpush1.bf16.msra.mxu0 0
        %1448 = vmatprep.subr.bf16.mxu0 0
        %1449 = vmatpush1.bf16.msra.mxu0 0
        %1450 = vmatprep.subr.bf16.mxu0 0
        %1451 = vmatpush1.bf16.msra.mxu0 0
        %1452 = vmatprep.subr.bf16.mxu0 0
        %1453 = vmatpush1.bf16.msra.mxu0 0
        %1454 = vmatprep.subr.bf16.mxu0 0
        %1455 = vmatpush1.bf16.msra.mxu0 0
        %1456 = vmatprep.subr.bf16.mxu0 0
        %1457 = vmatpush1.bf16.msra.mxu0 0
        %1458 = vmatprep.subr.bf16.mxu0 0
        %1459 = vmatpush1.bf16.msra.mxu0 0
        %1460 = vmatprep.subr.bf16.mxu0 0
        %1461 = vmatpush1.bf16.msra.mxu0 0
        %1462 = vmatprep.mubr.bf16.mxu0 0
        %1463 = vmatmul.mubr.bf16.gmra.mrb[0].mxu0 %v1373
        %v1464 = vpop.f32.mrb[0].mxu0
        %v1465 = vadd.f32 %v1270, %v1464
        %v1466 = vpop.f32.mrb[0].mxu0
        %v1467 = vadd.f32 %v1270, %v1466
        %v1468 = vpop.f32.mrb[0].mxu0
        %v1469 = vadd.f32 %v1275, %v1468
        %v1470 = vpop.f32.mrb[0].mxu0
        %v1471 = vadd.f32 %v1275, %v1470
        %1472 = vdwg.mxu0
        %v1473 = vmax.f32 %v1422, 0.0
        %v1474 = vmax.f32 %v1424, 0.0
        %v1475 = vmax.f32 %v1465, 0.0
        %v1476 = vmax.f32 %v1467, 0.0
        %v1477 = vmax.f32 %v1426, 0.0
        %v1478 = vmax.f32 %v1428, 0.0
        %v1479 = vmax.f32 %v1469, 0.0
        %v1480 = vmax.f32 %v1471, 0.0
        %1481 = vst [vmem:[%s273] sm:$0xff] %v1473
        %1482 = vst [vmem:[%s273 + $0x8] sm:$0xff] %v1474
        %1483 = vst [vmem:[%s273 + $0x10] sm:$0xff] %v1477
        %1484 = vst [vmem:[%s273 + $0x18] sm:$0xff] %v1478
        %s1485 = scalar_lea.vmem %s273, 32
        %1486 = vst [vmem:[%s1485] sm:$0xff] %v1475
        %1487 = vst [vmem:[%s1485 + $0x8] sm:$0xff] %v1476
        %1488 = vst [vmem:[%s1485 + $0x10] sm:$0xff] %v1479
        %1489 = vst [vmem:[%s1485 + $0x18] sm:$0xff] %v1480
        %s1490 = smul.u32 2, %s18
        %p1491 = scmp.lt.s32.totalorder %s1490, 3
        %s1492 = scalar_select %p1491, %s1490, 3
        %s1493 = smul.addr %s1492, 4
        %s1494 = smul.addr %s1493, 8
        %s1495 = scalar_lea.vmem %s6, %s1494
        // Predicated region
        $region49: #{decoder_block_forward.1} parent=43 // pred_check
          %p1496 = pneg %p167
        $region50: #{decoder_block_forward.1} parent=43 // pred_check_branch
          %1498 = sbr.rel (%p1496) target = $region52
        $region51: #{decoder_block_forward.1} parent=43 // pred_region
          %s1499 = smul.u32 2, %s18
        $region52: #{decoder_block_forward.1} parent=43 // pred_fallthru
          _
      $region44: #{decoder_block_forward.1} parent=5 // pred_fallthru
        _
      %p1500 = scmp.le.s32.totalorder 2, %s13
      // Predicated region
      $region53: #{decoder_block_forward.1} parent=5 // pred_check
        %p1501 = pneg %p1500
      $region54: #{decoder_block_forward.1} parent=5 // pred_check_branch
        %1503 = sbr.rel (%p1501) target = $region56
      $region55: #{decoder_block_forward.1} parent=5 // pred_region
        %s1504 = ssub.s32 %s13, 2
        // Predicated region
        $region57: #{decoder_block_forward.1} parent=55 // pred_check
          %p1505 = pneg %p173
        $region58: #{decoder_block_forward.1} parent=55 // pred_check_branch
          %1507 = sbr.rel (%p1505) target = $region60
        $region59: #{decoder_block_forward.1} parent=55 // pred_region
          %s1508 = smul.u32 2, %s19
          %p1509 = scmp.lt.s32.totalorder %s1508, 3
          %s1510 = scalar_select %p1509, %s1508, 3
          %s1511 = smul.addr %s1510, 4
          %s1512 = smul.addr %s1511, 8
          %s1513 = scalar_lea.vmem %s6, %s1512
        $region60: #{decoder_block_forward.1} parent=55 // pred_fallthru
          _
      $region56: #{decoder_block_forward.1} parent=5 // pred_fallthru
        _
    $region6: #{decoder_block_forward.1} parent=1 // loop_footer
      %s17 = sadd.s32 1, %s13
    $region7: #{decoder_block_forward.1} parent=1 // loop_footer_branch
      %12 = sbr.rel target = $region3
    $region8: #{decoder_block_forward.1} parent=1 // loop_exit
      _
    %1514 = vsyncpa [#allocation5], 1
    %s1515 = scalar_lea.sflag [#allocation5], 1
    %1516 = vsyncpa %s1515, 1

</llo_original>
